<compile_context>
chip_gen: v6e
topology: v6e:2x2x1
jax: 0.10.0
libtpu: 0.0.40
codegen_flags: <defaults>
</compile_context>

<pallas_src>
import jax
import jax.numpy as jnp
import numpy as np
from jax.experimental import pallas as pl
from jax.experimental.pallas import tpu as pltpu


def _lstm_chord_embedding_kernel(len_ref, x_ref, we_ref, be_ref,
                                 wih_ref, whh_ref, b_ref,
                                 wout_ref, bout_ref, out_ref):
    B = len_ref.shape[0]
    BT, _ = x_ref.shape
    T = BT // B
    H = whh_ref.shape[0]          # w_hh is (H, 4H)
    G4 = whh_ref.shape[1]         # 4H (gate-stacked lane axis)

    # ---- Embedding Linear + ReLU, hoisted: one (B*T, V) @ (V, E) matmul. ----
    emb = jnp.maximum(
        jnp.dot(x_ref[...], we_ref[...], preferred_element_type=jnp.float32)
        + be_ref[...], 0.0)                                     # (B*T, E)

    # ---- Gate-stacked input projection (bias fused), hoisted: one matmul. ---
    gx_flat = (jnp.dot(emb, wih_ref[...], preferred_element_type=jnp.float32)
               + b_ref[...])                                    # (B*T, 4H)
    gx_bt = gx_flat.reshape(B, T, G4)
    # Per-step (B, 4H) slabs extracted up front; they depend only on gx_flat,
    # so this re-layout work is off the serial h->h critical path.
    gx_steps = [gx_bt[:, t, :] for t in range(T)]               # T x (B, 4H)

    whh = whh_ref[...]                                          # (H, 4H), loop-invariant

    # ---- Sequential recurrence, fully unrolled; h/c and outputs are vregs. --
    h = jnp.zeros((B, H), jnp.float32)
    c = jnp.zeros((B, H), jnp.float32)
    h_list = []
    for t in range(T):
        gates = gx_steps[t] + jnp.dot(h, whh,
                                      preferred_element_type=jnp.float32)  # (B, 4H)
        i_g = jax.nn.sigmoid(gates[:, 0 * H:1 * H])
        f_g = jax.nn.sigmoid(gates[:, 1 * H:2 * H])
        g_g = jnp.tanh(gates[:, 2 * H:3 * H])
        o_g = jax.nn.sigmoid(gates[:, 3 * H:4 * H])
        c = f_g * c + i_g * g_g
        h = o_g * jnp.tanh(c)
        h_list.append(h)

    # ---- Pad-position masking fused with ReLU, built once from SMEM lengths.
    t_iota = jax.lax.broadcasted_iota(jnp.int32, (T, 1), 0)     # (T, 1)
    valid = jnp.concatenate(
        [(t_iota < len_ref[b]).astype(jnp.float32) for b in range(B)],
        axis=0)                                                 # (B*T, 1) in b*T+t order

    hs_flat = jnp.stack(h_list, axis=1).reshape(BT, H)          # (B*T, H)
    relu1 = jnp.maximum(hs_flat, 0.0) * valid                   # zeros padded rows

    # ---- Output Linear: one matmul, one lane-dense (B*T, 128) bulk store. ---
    logits = (jnp.dot(relu1, wout_ref[...], preferred_element_type=jnp.float32)
              + bout_ref[...])                                  # (B*T, Vp)
    out_ref[...] = logits.astype(out_ref.dtype)


def lstm_chord_embedding_forward(inputs, lengths, params):
    """inputs: (B, T, V) float32 batch-first; lengths: (B,) int.

    Returns (B, T, V). Valid positions carry the real module outputs; positions
    t >= lengths[b] equal the output-layer bias (zero LSTM output -> ReLU ->
    Linear), exactly like pad_packed_sequence followed by the Linear. PyTorch
    trims the time axis to max(lengths); slice statically if needed (the demo
    uses max(lengths) == T so no trim is required).
    """
    B, T, V = inputs.shape
    VP = params["w_out"].shape[1]                       # lane-padded vocab (mult of 128)
    x_flat = inputs.reshape(B * T, V)                   # contiguous -> free
    lens = lengths.astype(jnp.int32).reshape(B)

    smem = pl.BlockSpec(memory_space=pltpu.MemorySpace.SMEM)
    vmem = pl.BlockSpec(memory_space=pltpu.MemorySpace.VMEM)
    out_p = pl.pallas_call(
        _lstm_chord_embedding_kernel,
        out_shape=jax.ShapeDtypeStruct((B * T, VP), jnp.float32),
        in_specs=[smem] + [vmem] * 8,
        out_specs=vmem,
    )(lens, x_flat, params["w_embed"], params["b_embed"],
      params["w_ih"], params["w_hh"], params["b"],
      params["w_out"], params["b_out"])
    return out_p.reshape(B, T, VP)[:, :, :V]


def init_params(key, vocab_size, embed_size, hidden_size):
    """PyTorch-default-style init, stored in kernel-friendly layouts."""
    ks = jax.random.split(key, 8)
    u = lambda k, shape, bound: jax.random.uniform(
        k, shape, jnp.float32, -bound, bound)
    be = 1.0 / np.sqrt(vocab_size)        # nn.Linear(vocab, embed)
    bl = 1.0 / np.sqrt(hidden_size)       # nn.LSTM and nn.Linear(hidden, vocab)
    H = hidden_size

    w_embed = u(ks[0], (embed_size, vocab_size), be)            # PyTorch (E, V)
    b_embed = u(ks[1], (embed_size,), be)
    w_ih = u(ks[2], (4 * H, embed_size), bl)                    # (4H, E), gates i,f,g,o
    w_hh = u(ks[3], (4 * H, H), bl)                             # (4H, H)
    b_ih = u(ks[4], (4 * H,), bl)
    b_hh = u(ks[5], (4 * H,), bl)
    w_out = u(ks[6], (vocab_size, H), bl)                       # (V, H)
    b_out = u(ks[7], (vocab_size,), bl)

    # Lane-dense padded output projection (write full 128 lanes, slice in wrapper).
    VP = ((vocab_size + 127) // 128) * 128
    w_out_p = jnp.zeros((H, VP), jnp.float32).at[:, :vocab_size].set(w_out.T)
    b_out_p = jnp.zeros((1, VP), jnp.float32).at[:, :vocab_size].set(b_out)

    return {
        "w_embed": w_embed.T,                                   # (V, E)
        "b_embed": b_embed.reshape(1, embed_size),              # (1, E)
        # LSTM weights gate-stacked along the lane axis, PyTorch gate order
        # (i, f, g, o) occupying lanes [g*H:(g+1)*H].
        "w_ih": w_ih.T,                                         # (E, 4H)
        "w_hh": w_hh.T,                                         # (H, 4H)
        "b": (b_ih + b_hh).reshape(1, 4 * H),                   # (1, 4H)
        "w_out": w_out_p,                                       # (H, VP), zero-padded
        "b_out": b_out_p,                                       # (1, VP), zero-padded
    }


def _reference_forward(inputs, lengths, p):
    """Pure-JAX reference with PyTorch packed-sequence semantics (sanity check)."""
    B, T, V = inputs.shape
    H = p["w_hh"].shape[0]

    emb = jnp.maximum(inputs @ p["w_embed"] + p["b_embed"][0], 0.0)    # (B, T, E)
    w_ih, w_hh, b = p["w_ih"], p["w_hh"], p["b"][0]
    w_out, b_out = p["w_out"][:, :V], p["b_out"][0, :V]

    def step(carry, t):
        h, c = carry
        x_t = emb[:, t, :]
        gates = x_t @ w_ih + h @ w_hh + b
        i = jax.nn.sigmoid(gates[:, :H])
        f = jax.nn.sigmoid(gates[:, H:2 * H])
        g = jnp.tanh(gates[:, 2 * H:3 * H])
        o = jax.nn.sigmoid(gates[:, 3 * H:])
        c_new = f * c + i * g
        h_new = o * jnp.tanh(c_new)
        m = (t < lengths)[:, None]
        return ((jnp.where(m, h_new, h), jnp.where(m, c_new, c)),
                jnp.where(m, h_new, 0.0))

    init = (jnp.zeros((B, H), jnp.float32), jnp.zeros((B, H), jnp.float32))
    _, hs = jax.lax.scan(step, init, jnp.arange(T))
    hs = jnp.transpose(hs, (1, 0, 2))                                  # (B, T, H)
    return jnp.maximum(hs, 0.0) @ w_out + b_out


if __name__ == "__main__":
    VOCAB, EMBED, HIDDEN = 16, 24, 32      # vocab_size, embed_size, lstm_hidden
    B, T = 4, 8

    key = jax.random.PRNGKey(0)
    k_x, k_p = jax.random.split(key)
    params = init_params(k_p, VOCAB, EMBED, HIDDEN)

    inputs = jax.random.normal(k_x, (B, T, VOCAB), jnp.float32)    # (B, T, V)
    lengths = jnp.array([6, 8, 3, 5], dtype=jnp.int32)             # max == T

    fwd = jax.jit(lstm_chord_embedding_forward)
    out = jax.block_until_ready(fwd(inputs, lengths, params))

    ref = _reference_forward(inputs, lengths, params)
    np.testing.assert_allclose(np.asarray(out), np.asarray(ref),
                               atol=2e-5, rtol=2e-5)

    print("KERNEL_OK")
</pallas_src>

<mosaic_0001>
module attributes {stable_mosaic.version = 11 : i64} {
  func.func @_lstm_chord_embedding_kernel(%arg0: memref<4xi32, #tpu.memory_space<smem>>, %arg1: memref<32x16xf32, #tpu.memory_space<vmem>>, %arg2: memref<16x24xf32, #tpu.memory_space<vmem>>, %arg3: memref<1x24xf32, #tpu.memory_space<vmem>>, %arg4: memref<24x128xf32, #tpu.memory_space<vmem>>, %arg5: memref<32x128xf32, #tpu.memory_space<vmem>>, %arg6: memref<1x128xf32, #tpu.memory_space<vmem>>, %arg7: memref<32x128xf32, #tpu.memory_space<vmem>>, %arg8: memref<1x128xf32, #tpu.memory_space<vmem>>, %arg9: memref<32x128xf32, #tpu.memory_space<vmem>>) attributes {dimension_semantics = [], scalar_prefetch = 0 : i64, scratch_operands = 0 : i64, tpu.core_type = #tpu.core_type<tc>} {
    %c0 = arith.constant 0 : index
    %c0_0 = arith.constant 0 : index
    %0 = vector.load %arg1[%c0, %c0_0] : memref<32x16xf32, #tpu.memory_space<vmem>>, vector<32x16xf32>
    %c0_1 = arith.constant 0 : index
    %c0_2 = arith.constant 0 : index
    %1 = vector.load %arg2[%c0_1, %c0_2] : memref<16x24xf32, #tpu.memory_space<vmem>>, vector<16x24xf32>
    %cst = arith.constant dense<0.000000e+00> : vector<32x24xf32>
    %2 = tpu.matmul %0, %1, %cst {dimension_numbers = #tpu.dot_dimension_numbers<[1], [0], [0], [1], [0, 0, 1, 1], [], []>} : vector<32x16xf32>, vector<16x24xf32>, vector<32x24xf32> -> vector<32x24xf32>
    %c0_3 = arith.constant 0 : index
    %c0_4 = arith.constant 0 : index
    %3 = vector.load %arg3[%c0_3, %c0_4] : memref<1x24xf32, #tpu.memory_space<vmem>>, vector<1x24xf32>
    %4 = vector.broadcast %3 : vector<1x24xf32> to vector<32x24xf32>
    %5 = arith.addf %2, %4 : vector<32x24xf32>
    %cst_5 = arith.constant 0.000000e+00 : f32
    %6 = vector.broadcast %cst_5 : f32 to vector<32x24xf32>
    %7 = arith.maximumf %5, %6 : vector<32x24xf32>
    %c0_6 = arith.constant 0 : index
    %c0_7 = arith.constant 0 : index
    %8 = vector.load %arg4[%c0_6, %c0_7] : memref<24x128xf32, #tpu.memory_space<vmem>>, vector<24x128xf32>
    %cst_8 = arith.constant dense<0.000000e+00> : vector<32x128xf32>
    %9 = tpu.matmul %7, %8, %cst_8 {dimension_numbers = #tpu.dot_dimension_numbers<[1], [0], [0], [1], [0, 0, 1, 1], [], []>} : vector<32x24xf32>, vector<24x128xf32>, vector<32x128xf32> -> vector<32x128xf32>
    %c0_9 = arith.constant 0 : index
    %c0_10 = arith.constant 0 : index
    %10 = vector.load %arg6[%c0_9, %c0_10] : memref<1x128xf32, #tpu.memory_space<vmem>>, vector<1x128xf32>
    %11 = vector.broadcast %10 : vector<1x128xf32> to vector<32x128xf32>
    %12 = arith.addf %9, %11 : vector<32x128xf32>
    %13 = vector.shape_cast %12 : vector<32x128xf32> to vector<4x8x128xf32>
    %14 = vector.extract_strided_slice %13 {offsets = [0, 0, 0], sizes = [4, 1, 128], strides = [1, 1, 1]} : vector<4x8x128xf32> to vector<4x1x128xf32>
    %15 = vector.shape_cast %14 : vector<4x1x128xf32> to vector<4x128xf32>
    %16 = vector.extract_strided_slice %13 {offsets = [0, 1, 0], sizes = [4, 1, 128], strides = [1, 1, 1]} : vector<4x8x128xf32> to vector<4x1x128xf32>
    %17 = vector.shape_cast %16 : vector<4x1x128xf32> to vector<4x128xf32>
    %18 = vector.extract_strided_slice %13 {offsets = [0, 2, 0], sizes = [4, 1, 128], strides = [1, 1, 1]} : vector<4x8x128xf32> to vector<4x1x128xf32>
    %19 = vector.shape_cast %18 : vector<4x1x128xf32> to vector<4x128xf32>
    %20 = vector.extract_strided_slice %13 {offsets = [0, 3, 0], sizes = [4, 1, 128], strides = [1, 1, 1]} : vector<4x8x128xf32> to vector<4x1x128xf32>
    %21 = vector.shape_cast %20 : vector<4x1x128xf32> to vector<4x128xf32>
    %22 = vector.extract_strided_slice %13 {offsets = [0, 4, 0], sizes = [4, 1, 128], strides = [1, 1, 1]} : vector<4x8x128xf32> to vector<4x1x128xf32>
    %23 = vector.shape_cast %22 : vector<4x1x128xf32> to vector<4x128xf32>
    %24 = vector.extract_strided_slice %13 {offsets = [0, 5, 0], sizes = [4, 1, 128], strides = [1, 1, 1]} : vector<4x8x128xf32> to vector<4x1x128xf32>
    %25 = vector.shape_cast %24 : vector<4x1x128xf32> to vector<4x128xf32>
    %26 = vector.extract_strided_slice %13 {offsets = [0, 6, 0], sizes = [4, 1, 128], strides = [1, 1, 1]} : vector<4x8x128xf32> to vector<4x1x128xf32>
    %27 = vector.shape_cast %26 : vector<4x1x128xf32> to vector<4x128xf32>
    %28 = vector.extract_strided_slice %13 {offsets = [0, 7, 0], sizes = [4, 1, 128], strides = [1, 1, 1]} : vector<4x8x128xf32> to vector<4x1x128xf32>
    %29 = vector.shape_cast %28 : vector<4x1x128xf32> to vector<4x128xf32>
    %c0_11 = arith.constant 0 : index
    %c0_12 = arith.constant 0 : index
    %30 = vector.load %arg5[%c0_11, %c0_12] : memref<32x128xf32, #tpu.memory_space<vmem>>, vector<32x128xf32>
    %cst_13 = arith.constant 0.000000e+00 : f32
    %31 = vector.broadcast %cst_13 : f32 to vector<4x32xf32>
    %cst_14 = arith.constant 0.000000e+00 : f32
    %32 = vector.broadcast %cst_14 : f32 to vector<4x32xf32>
    %cst_15 = arith.constant dense<0.000000e+00> : vector<4x128xf32>
    %33 = tpu.matmul %31, %30, %cst_15 {dimension_numbers = #tpu.dot_dimension_numbers<[1], [0], [0], [1], [0, 0, 1, 1], [], []>} : vector<4x32xf32>, vector<32x128xf32>, vector<4x128xf32> -> vector<4x128xf32>
    %34 = arith.addf %15, %33 : vector<4x128xf32>
    %35 = vector.extract_strided_slice %34 {offsets = [0, 0], sizes = [4, 32], strides = [1, 1]} : vector<4x128xf32> to vector<4x32xf32>
    %36 = arith.negf %35 : vector<4x32xf32>
    %37 = math.exp %36 : vector<4x32xf32>
    %cst_16 = arith.constant 1.000000e+00 : f32
    %38 = vector.broadcast %cst_16 : f32 to vector<4x32xf32>
    %39 = arith.addf %38, %37 : vector<4x32xf32>
    %40 = arith.divf %38, %39 : vector<4x32xf32>
    %41 = vector.extract_strided_slice %34 {offsets = [0, 32], sizes = [4, 32], strides = [1, 1]} : vector<4x128xf32> to vector<4x32xf32>
    %42 = arith.negf %41 : vector<4x32xf32>
    %43 = math.exp %42 : vector<4x32xf32>
    %cst_17 = arith.constant 1.000000e+00 : f32
    %44 = vector.broadcast %cst_17 : f32 to vector<4x32xf32>
    %45 = arith.addf %44, %43 : vector<4x32xf32>
    %46 = arith.divf %44, %45 : vector<4x32xf32>
    %47 = vector.extract_strided_slice %34 {offsets = [0, 64], sizes = [4, 32], strides = [1, 1]} : vector<4x128xf32> to vector<4x32xf32>
    %48 = math.tanh %47 : vector<4x32xf32>
    %49 = vector.extract_strided_slice %34 {offsets = [0, 96], sizes = [4, 32], strides = [1, 1]} : vector<4x128xf32> to vector<4x32xf32>
    %50 = arith.negf %49 : vector<4x32xf32>
    %51 = math.exp %50 : vector<4x32xf32>
    %cst_18 = arith.constant 1.000000e+00 : f32
    %52 = vector.broadcast %cst_18 : f32 to vector<4x32xf32>
    %53 = arith.addf %52, %51 : vector<4x32xf32>
    %54 = arith.divf %52, %53 : vector<4x32xf32>
    %55 = arith.mulf %46, %32 : vector<4x32xf32>
    %56 = arith.mulf %40, %48 : vector<4x32xf32>
    %57 = arith.addf %55, %56 : vector<4x32xf32>
    %58 = math.tanh %57 : vector<4x32xf32>
    %59 = arith.mulf %54, %58 : vector<4x32xf32>
    %cst_19 = arith.constant dense<0.000000e+00> : vector<4x128xf32>
    %60 = tpu.matmul %59, %30, %cst_19 {dimension_numbers = #tpu.dot_dimension_numbers<[1], [0], [0], [1], [0, 0, 1, 1], [], []>} : vector<4x32xf32>, vector<32x128xf32>, vector<4x128xf32> -> vector<4x128xf32>
    %61 = arith.addf %17, %60 : vector<4x128xf32>
    %62 = vector.extract_strided_slice %61 {offsets = [0, 0], sizes = [4, 32], strides = [1, 1]} : vector<4x128xf32> to vector<4x32xf32>
    %63 = arith.negf %62 : vector<4x32xf32>
    %64 = math.exp %63 : vector<4x32xf32>
    %cst_20 = arith.constant 1.000000e+00 : f32
    %65 = vector.broadcast %cst_20 : f32 to vector<4x32xf32>
    %66 = arith.addf %65, %64 : vector<4x32xf32>
    %67 = arith.divf %65, %66 : vector<4x32xf32>
    %68 = vector.extract_strided_slice %61 {offsets = [0, 32], sizes = [4, 32], strides = [1, 1]} : vector<4x128xf32> to vector<4x32xf32>
    %69 = arith.negf %68 : vector<4x32xf32>
    %70 = math.exp %69 : vector<4x32xf32>
    %cst_21 = arith.constant 1.000000e+00 : f32
    %71 = vector.broadcast %cst_21 : f32 to vector<4x32xf32>
    %72 = arith.addf %71, %70 : vector<4x32xf32>
    %73 = arith.divf %71, %72 : vector<4x32xf32>
    %74 = vector.extract_strided_slice %61 {offsets = [0, 64], sizes = [4, 32], strides = [1, 1]} : vector<4x128xf32> to vector<4x32xf32>
    %75 = math.tanh %74 : vector<4x32xf32>
    %76 = vector.extract_strided_slice %61 {offsets = [0, 96], sizes = [4, 32], strides = [1, 1]} : vector<4x128xf32> to vector<4x32xf32>
    %77 = arith.negf %76 : vector<4x32xf32>
    %78 = math.exp %77 : vector<4x32xf32>
    %cst_22 = arith.constant 1.000000e+00 : f32
    %79 = vector.broadcast %cst_22 : f32 to vector<4x32xf32>
    %80 = arith.addf %79, %78 : vector<4x32xf32>
    %81 = arith.divf %79, %80 : vector<4x32xf32>
    %82 = arith.mulf %73, %57 : vector<4x32xf32>
    %83 = arith.mulf %67, %75 : vector<4x32xf32>
    %84 = arith.addf %82, %83 : vector<4x32xf32>
    %85 = math.tanh %84 : vector<4x32xf32>
    %86 = arith.mulf %81, %85 : vector<4x32xf32>
    %cst_23 = arith.constant dense<0.000000e+00> : vector<4x128xf32>
    %87 = tpu.matmul %86, %30, %cst_23 {dimension_numbers = #tpu.dot_dimension_numbers<[1], [0], [0], [1], [0, 0, 1, 1], [], []>} : vector<4x32xf32>, vector<32x128xf32>, vector<4x128xf32> -> vector<4x128xf32>
    %88 = arith.addf %19, %87 : vector<4x128xf32>
    %89 = vector.extract_strided_slice %88 {offsets = [0, 0], sizes = [4, 32], strides = [1, 1]} : vector<4x128xf32> to vector<4x32xf32>
    %90 = arith.negf %89 : vector<4x32xf32>
    %91 = math.exp %90 : vector<4x32xf32>
    %cst_24 = arith.constant 1.000000e+00 : f32
    %92 = vector.broadcast %cst_24 : f32 to vector<4x32xf32>
    %93 = arith.addf %92, %91 : vector<4x32xf32>
    %94 = arith.divf %92, %93 : vector<4x32xf32>
    %95 = vector.extract_strided_slice %88 {offsets = [0, 32], sizes = [4, 32], strides = [1, 1]} : vector<4x128xf32> to vector<4x32xf32>
    %96 = arith.negf %95 : vector<4x32xf32>
    %97 = math.exp %96 : vector<4x32xf32>
    %cst_25 = arith.constant 1.000000e+00 : f32
    %98 = vector.broadcast %cst_25 : f32 to vector<4x32xf32>
    %99 = arith.addf %98, %97 : vector<4x32xf32>
    %100 = arith.divf %98, %99 : vector<4x32xf32>
    %101 = vector.extract_strided_slice %88 {offsets = [0, 64], sizes = [4, 32], strides = [1, 1]} : vector<4x128xf32> to vector<4x32xf32>
    %102 = math.tanh %101 : vector<4x32xf32>
    %103 = vector.extract_strided_slice %88 {offsets = [0, 96], sizes = [4, 32], strides = [1, 1]} : vector<4x128xf32> to vector<4x32xf32>
    %104 = arith.negf %103 : vector<4x32xf32>
    %105 = math.exp %104 : vector<4x32xf32>
    %cst_26 = arith.constant 1.000000e+00 : f32
    %106 = vector.broadcast %cst_26 : f32 to vector<4x32xf32>
    %107 = arith.addf %106, %105 : vector<4x32xf32>
    %108 = arith.divf %106, %107 : vector<4x32xf32>
    %109 = arith.mulf %100, %84 : vector<4x32xf32>
    %110 = arith.mulf %94, %102 : vector<4x32xf32>
    %111 = arith.addf %109, %110 : vector<4x32xf32>
    %112 = math.tanh %111 : vector<4x32xf32>
    %113 = arith.mulf %108, %112 : vector<4x32xf32>
    %cst_27 = arith.constant dense<0.000000e+00> : vector<4x128xf32>
    %114 = tpu.matmul %113, %30, %cst_27 {dimension_numbers = #tpu.dot_dimension_numbers<[1], [0], [0], [1], [0, 0, 1, 1], [], []>} : vector<4x32xf32>, vector<32x128xf32>, vector<4x128xf32> -> vector<4x128xf32>
    %115 = arith.addf %21, %114 : vector<4x128xf32>
    %116 = vector.extract_strided_slice %115 {offsets = [0, 0], sizes = [4, 32], strides = [1, 1]} : vector<4x128xf32> to vector<4x32xf32>
    %117 = arith.negf %116 : vector<4x32xf32>
    %118 = math.exp %117 : vector<4x32xf32>
    %cst_28 = arith.constant 1.000000e+00 : f32
    %119 = vector.broadcast %cst_28 : f32 to vector<4x32xf32>
    %120 = arith.addf %119, %118 : vector<4x32xf32>
    %121 = arith.divf %119, %120 : vector<4x32xf32>
    %122 = vector.extract_strided_slice %115 {offsets = [0, 32], sizes = [4, 32], strides = [1, 1]} : vector<4x128xf32> to vector<4x32xf32>
    %123 = arith.negf %122 : vector<4x32xf32>
    %124 = math.exp %123 : vector<4x32xf32>
    %cst_29 = arith.constant 1.000000e+00 : f32
    %125 = vector.broadcast %cst_29 : f32 to vector<4x32xf32>
    %126 = arith.addf %125, %124 : vector<4x32xf32>
    %127 = arith.divf %125, %126 : vector<4x32xf32>
    %128 = vector.extract_strided_slice %115 {offsets = [0, 64], sizes = [4, 32], strides = [1, 1]} : vector<4x128xf32> to vector<4x32xf32>
    %129 = math.tanh %128 : vector<4x32xf32>
    %130 = vector.extract_strided_slice %115 {offsets = [0, 96], sizes = [4, 32], strides = [1, 1]} : vector<4x128xf32> to vector<4x32xf32>
    %131 = arith.negf %130 : vector<4x32xf32>
    %132 = math.exp %131 : vector<4x32xf32>
    %cst_30 = arith.constant 1.000000e+00 : f32
    %133 = vector.broadcast %cst_30 : f32 to vector<4x32xf32>
    %134 = arith.addf %133, %132 : vector<4x32xf32>
    %135 = arith.divf %133, %134 : vector<4x32xf32>
    %136 = arith.mulf %127, %111 : vector<4x32xf32>
    %137 = arith.mulf %121, %129 : vector<4x32xf32>
    %138 = arith.addf %136, %137 : vector<4x32xf32>
    %139 = math.tanh %138 : vector<4x32xf32>
    %140 = arith.mulf %135, %139 : vector<4x32xf32>
    %cst_31 = arith.constant dense<0.000000e+00> : vector<4x128xf32>
    %141 = tpu.matmul %140, %30, %cst_31 {dimension_numbers = #tpu.dot_dimension_numbers<[1], [0], [0], [1], [0, 0, 1, 1], [], []>} : vector<4x32xf32>, vector<32x128xf32>, vector<4x128xf32> -> vector<4x128xf32>
    %142 = arith.addf %23, %141 : vector<4x128xf32>
    %143 = vector.extract_strided_slice %142 {offsets = [0, 0], sizes = [4, 32], strides = [1, 1]} : vector<4x128xf32> to vector<4x32xf32>
    %144 = arith.negf %143 : vector<4x32xf32>
    %145 = math.exp %144 : vector<4x32xf32>
    %cst_32 = arith.constant 1.000000e+00 : f32
    %146 = vector.broadcast %cst_32 : f32 to vector<4x32xf32>
    %147 = arith.addf %146, %145 : vector<4x32xf32>
    %148 = arith.divf %146, %147 : vector<4x32xf32>
    %149 = vector.extract_strided_slice %142 {offsets = [0, 32], sizes = [4, 32], strides = [1, 1]} : vector<4x128xf32> to vector<4x32xf32>
    %150 = arith.negf %149 : vector<4x32xf32>
    %151 = math.exp %150 : vector<4x32xf32>
    %cst_33 = arith.constant 1.000000e+00 : f32
    %152 = vector.broadcast %cst_33 : f32 to vector<4x32xf32>
    %153 = arith.addf %152, %151 : vector<4x32xf32>
    %154 = arith.divf %152, %153 : vector<4x32xf32>
    %155 = vector.extract_strided_slice %142 {offsets = [0, 64], sizes = [4, 32], strides = [1, 1]} : vector<4x128xf32> to vector<4x32xf32>
    %156 = math.tanh %155 : vector<4x32xf32>
    %157 = vector.extract_strided_slice %142 {offsets = [0, 96], sizes = [4, 32], strides = [1, 1]} : vector<4x128xf32> to vector<4x32xf32>
    %158 = arith.negf %157 : vector<4x32xf32>
    %159 = math.exp %158 : vector<4x32xf32>
    %cst_34 = arith.constant 1.000000e+00 : f32
    %160 = vector.broadcast %cst_34 : f32 to vector<4x32xf32>
    %161 = arith.addf %160, %159 : vector<4x32xf32>
    %162 = arith.divf %160, %161 : vector<4x32xf32>
    %163 = arith.mulf %154, %138 : vector<4x32xf32>
    %164 = arith.mulf %148, %156 : vector<4x32xf32>
    %165 = arith.addf %163, %164 : vector<4x32xf32>
    %166 = math.tanh %165 : vector<4x32xf32>
    %167 = arith.mulf %162, %166 : vector<4x32xf32>
    %cst_35 = arith.constant dense<0.000000e+00> : vector<4x128xf32>
    %168 = tpu.matmul %167, %30, %cst_35 {dimension_numbers = #tpu.dot_dimension_numbers<[1], [0], [0], [1], [0, 0, 1, 1], [], []>} : vector<4x32xf32>, vector<32x128xf32>, vector<4x128xf32> -> vector<4x128xf32>
    %169 = arith.addf %25, %168 : vector<4x128xf32>
    %170 = vector.extract_strided_slice %169 {offsets = [0, 0], sizes = [4, 32], strides = [1, 1]} : vector<4x128xf32> to vector<4x32xf32>
    %171 = arith.negf %170 : vector<4x32xf32>
    %172 = math.exp %171 : vector<4x32xf32>
    %cst_36 = arith.constant 1.000000e+00 : f32
    %173 = vector.broadcast %cst_36 : f32 to vector<4x32xf32>
    %174 = arith.addf %173, %172 : vector<4x32xf32>
    %175 = arith.divf %173, %174 : vector<4x32xf32>
    %176 = vector.extract_strided_slice %169 {offsets = [0, 32], sizes = [4, 32], strides = [1, 1]} : vector<4x128xf32> to vector<4x32xf32>
    %177 = arith.negf %176 : vector<4x32xf32>
    %178 = math.exp %177 : vector<4x32xf32>
    %cst_37 = arith.constant 1.000000e+00 : f32
    %179 = vector.broadcast %cst_37 : f32 to vector<4x32xf32>
    %180 = arith.addf %179, %178 : vector<4x32xf32>
    %181 = arith.divf %179, %180 : vector<4x32xf32>
    %182 = vector.extract_strided_slice %169 {offsets = [0, 64], sizes = [4, 32], strides = [1, 1]} : vector<4x128xf32> to vector<4x32xf32>
    %183 = math.tanh %182 : vector<4x32xf32>
    %184 = vector.extract_strided_slice %169 {offsets = [0, 96], sizes = [4, 32], strides = [1, 1]} : vector<4x128xf32> to vector<4x32xf32>
    %185 = arith.negf %184 : vector<4x32xf32>
    %186 = math.exp %185 : vector<4x32xf32>
    %cst_38 = arith.constant 1.000000e+00 : f32
    %187 = vector.broadcast %cst_38 : f32 to vector<4x32xf32>
    %188 = arith.addf %187, %186 : vector<4x32xf32>
    %189 = arith.divf %187, %188 : vector<4x32xf32>
    %190 = arith.mulf %181, %165 : vector<4x32xf32>
    %191 = arith.mulf %175, %183 : vector<4x32xf32>
    %192 = arith.addf %190, %191 : vector<4x32xf32>
    %193 = math.tanh %192 : vector<4x32xf32>
    %194 = arith.mulf %189, %193 : vector<4x32xf32>
    %cst_39 = arith.constant dense<0.000000e+00> : vector<4x128xf32>
    %195 = tpu.matmul %194, %30, %cst_39 {dimension_numbers = #tpu.dot_dimension_numbers<[1], [0], [0], [1], [0, 0, 1, 1], [], []>} : vector<4x32xf32>, vector<32x128xf32>, vector<4x128xf32> -> vector<4x128xf32>
    %196 = arith.addf %27, %195 : vector<4x128xf32>
    %197 = vector.extract_strided_slice %196 {offsets = [0, 0], sizes = [4, 32], strides = [1, 1]} : vector<4x128xf32> to vector<4x32xf32>
    %198 = arith.negf %197 : vector<4x32xf32>
    %199 = math.exp %198 : vector<4x32xf32>
    %cst_40 = arith.constant 1.000000e+00 : f32
    %200 = vector.broadcast %cst_40 : f32 to vector<4x32xf32>
    %201 = arith.addf %200, %199 : vector<4x32xf32>
    %202 = arith.divf %200, %201 : vector<4x32xf32>
    %203 = vector.extract_strided_slice %196 {offsets = [0, 32], sizes = [4, 32], strides = [1, 1]} : vector<4x128xf32> to vector<4x32xf32>
    %204 = arith.negf %203 : vector<4x32xf32>
    %205 = math.exp %204 : vector<4x32xf32>
    %cst_41 = arith.constant 1.000000e+00 : f32
    %206 = vector.broadcast %cst_41 : f32 to vector<4x32xf32>
    %207 = arith.addf %206, %205 : vector<4x32xf32>
    %208 = arith.divf %206, %207 : vector<4x32xf32>
    %209 = vector.extract_strided_slice %196 {offsets = [0, 64], sizes = [4, 32], strides = [1, 1]} : vector<4x128xf32> to vector<4x32xf32>
    %210 = math.tanh %209 : vector<4x32xf32>
    %211 = vector.extract_strided_slice %196 {offsets = [0, 96], sizes = [4, 32], strides = [1, 1]} : vector<4x128xf32> to vector<4x32xf32>
    %212 = arith.negf %211 : vector<4x32xf32>
    %213 = math.exp %212 : vector<4x32xf32>
    %cst_42 = arith.constant 1.000000e+00 : f32
    %214 = vector.broadcast %cst_42 : f32 to vector<4x32xf32>
    %215 = arith.addf %214, %213 : vector<4x32xf32>
    %216 = arith.divf %214, %215 : vector<4x32xf32>
    %217 = arith.mulf %208, %192 : vector<4x32xf32>
    %218 = arith.mulf %202, %210 : vector<4x32xf32>
    %219 = arith.addf %217, %218 : vector<4x32xf32>
    %220 = math.tanh %219 : vector<4x32xf32>
    %221 = arith.mulf %216, %220 : vector<4x32xf32>
    %cst_43 = arith.constant dense<0.000000e+00> : vector<4x128xf32>
    %222 = tpu.matmul %221, %30, %cst_43 {dimension_numbers = #tpu.dot_dimension_numbers<[1], [0], [0], [1], [0, 0, 1, 1], [], []>} : vector<4x32xf32>, vector<32x128xf32>, vector<4x128xf32> -> vector<4x128xf32>
    %223 = arith.addf %29, %222 : vector<4x128xf32>
    %224 = vector.extract_strided_slice %223 {offsets = [0, 0], sizes = [4, 32], strides = [1, 1]} : vector<4x128xf32> to vector<4x32xf32>
    %225 = arith.negf %224 : vector<4x32xf32>
    %226 = math.exp %225 : vector<4x32xf32>
    %cst_44 = arith.constant 1.000000e+00 : f32
    %227 = vector.broadcast %cst_44 : f32 to vector<4x32xf32>
    %228 = arith.addf %227, %226 : vector<4x32xf32>
    %229 = arith.divf %227, %228 : vector<4x32xf32>
    %230 = vector.extract_strided_slice %223 {offsets = [0, 32], sizes = [4, 32], strides = [1, 1]} : vector<4x128xf32> to vector<4x32xf32>
    %231 = arith.negf %230 : vector<4x32xf32>
    %232 = math.exp %231 : vector<4x32xf32>
    %cst_45 = arith.constant 1.000000e+00 : f32
    %233 = vector.broadcast %cst_45 : f32 to vector<4x32xf32>
    %234 = arith.addf %233, %232 : vector<4x32xf32>
    %235 = arith.divf %233, %234 : vector<4x32xf32>
    %236 = vector.extract_strided_slice %223 {offsets = [0, 64], sizes = [4, 32], strides = [1, 1]} : vector<4x128xf32> to vector<4x32xf32>
    %237 = math.tanh %236 : vector<4x32xf32>
    %238 = vector.extract_strided_slice %223 {offsets = [0, 96], sizes = [4, 32], strides = [1, 1]} : vector<4x128xf32> to vector<4x32xf32>
    %239 = arith.negf %238 : vector<4x32xf32>
    %240 = math.exp %239 : vector<4x32xf32>
    %cst_46 = arith.constant 1.000000e+00 : f32
    %241 = vector.broadcast %cst_46 : f32 to vector<4x32xf32>
    %242 = arith.addf %241, %240 : vector<4x32xf32>
    %243 = arith.divf %241, %242 : vector<4x32xf32>
    %244 = arith.mulf %235, %219 : vector<4x32xf32>
    %245 = arith.mulf %229, %237 : vector<4x32xf32>
    %246 = arith.addf %244, %245 : vector<4x32xf32>
    %247 = math.tanh %246 : vector<4x32xf32>
    %248 = arith.mulf %243, %247 : vector<4x32xf32>
    %249 = tpu.iota {dimensions = array<i32: 0>} : vector<8x1xi32>
    %c0_47 = arith.constant 0 : index
    %250 = memref.load %arg0[%c0_47] : memref<4xi32, #tpu.memory_space<smem>>
    %251 = vector.broadcast %250 : i32 to vector<8x1xi32>
    %252 = arith.cmpi slt, %249, %251 : vector<8x1xi32>
    %253 = arith.extui %252 : vector<8x1xi1> to vector<8x1xi32>
    %254 = arith.sitofp %253 : vector<8x1xi32> to vector<8x1xf32>
    %c1 = arith.constant 1 : index
    %255 = memref.load %arg0[%c1] : memref<4xi32, #tpu.memory_space<smem>>
    %256 = vector.broadcast %255 : i32 to vector<8x1xi32>
    %257 = arith.cmpi slt, %249, %256 : vector<8x1xi32>
    %258 = arith.extui %257 : vector<8x1xi1> to vector<8x1xi32>
    %259 = arith.sitofp %258 : vector<8x1xi32> to vector<8x1xf32>
    %c2 = arith.constant 2 : index
    %260 = memref.load %arg0[%c2] : memref<4xi32, #tpu.memory_space<smem>>
    %261 = vector.broadcast %260 : i32 to vector<8x1xi32>
    %262 = arith.cmpi slt, %249, %261 : vector<8x1xi32>
    %263 = arith.extui %262 : vector<8x1xi1> to vector<8x1xi32>
    %264 = arith.sitofp %263 : vector<8x1xi32> to vector<8x1xf32>
    %c3 = arith.constant 3 : index
    %265 = memref.load %arg0[%c3] : memref<4xi32, #tpu.memory_space<smem>>
    %266 = vector.broadcast %265 : i32 to vector<8x1xi32>
    %267 = arith.cmpi slt, %249, %266 : vector<8x1xi32>
    %268 = arith.extui %267 : vector<8x1xi1> to vector<8x1xi32>
    %269 = arith.sitofp %268 : vector<8x1xi32> to vector<8x1xf32>
    %270 = tpu.concatenate %254, %259, %264, %269 in 0 : vector<8x1xf32>, vector<8x1xf32>, vector<8x1xf32>, vector<8x1xf32> -> vector<32x1xf32>
    %271 = vector.shape_cast %59 : vector<4x32xf32> to vector<4x1x32xf32>
    %272 = vector.shape_cast %86 : vector<4x32xf32> to vector<4x1x32xf32>
    %273 = vector.shape_cast %113 : vector<4x32xf32> to vector<4x1x32xf32>
    %274 = vector.shape_cast %140 : vector<4x32xf32> to vector<4x1x32xf32>
    %275 = vector.shape_cast %167 : vector<4x32xf32> to vector<4x1x32xf32>
    %276 = vector.shape_cast %194 : vector<4x32xf32> to vector<4x1x32xf32>
    %277 = vector.shape_cast %221 : vector<4x32xf32> to vector<4x1x32xf32>
    %278 = vector.shape_cast %248 : vector<4x32xf32> to vector<4x1x32xf32>
    %279 = tpu.concatenate %271, %272, %273, %274, %275, %276, %277, %278 in 1 : vector<4x1x32xf32>, vector<4x1x32xf32>, vector<4x1x32xf32>, vector<4x1x32xf32>, vector<4x1x32xf32>, vector<4x1x32xf32>, vector<4x1x32xf32>, vector<4x1x32xf32> -> vector<4x8x32xf32>
    %280 = vector.shape_cast %279 : vector<4x8x32xf32> to vector<32x32xf32>
    %cst_48 = arith.constant 0.000000e+00 : f32
    %281 = vector.broadcast %cst_48 : f32 to vector<32x32xf32>
    %282 = arith.maximumf %280, %281 : vector<32x32xf32>
    %283 = vector.broadcast %270 : vector<32x1xf32> to vector<32x32xf32>
    %284 = arith.mulf %282, %283 : vector<32x32xf32>
    %c0_49 = arith.constant 0 : index
    %c0_50 = arith.constant 0 : index
    %285 = vector.load %arg7[%c0_49, %c0_50] : memref<32x128xf32, #tpu.memory_space<vmem>>, vector<32x128xf32>
    %cst_51 = arith.constant dense<0.000000e+00> : vector<32x128xf32>
    %286 = tpu.matmul %284, %285, %cst_51 {dimension_numbers = #tpu.dot_dimension_numbers<[1], [0], [0], [1], [0, 0, 1, 1], [], []>} : vector<32x32xf32>, vector<32x128xf32>, vector<32x128xf32> -> vector<32x128xf32>
    %c0_52 = arith.constant 0 : index
    %c0_53 = arith.constant 0 : index
    %287 = vector.load %arg8[%c0_52, %c0_53] : memref<1x128xf32, #tpu.memory_space<vmem>>, vector<1x128xf32>
    %288 = vector.broadcast %287 : vector<1x128xf32> to vector<32x128xf32>
    %289 = arith.addf %286, %288 : vector<32x128xf32>
    %c0_54 = arith.constant 0 : index
    %c0_55 = arith.constant 0 : index
    %290 = vector.load %arg9[%c0_54, %c0_55] : memref<32x128xf32, #tpu.memory_space<vmem>>, vector<32x128xf32>
    tpu.vector_store %arg9[%c0_54, %c0_55], %289 {strides = array<i32>} : memref<32x128xf32, #tpu.memory_space<vmem>>, vector<32x128xf32>,
    return
  }
}

</mosaic_0001>

<llo_original>
// kernel: lstm_chord_embedding_forward.1
$region0: #{lstm_chord_embedding_forward.1}
  #allocation0 [shape = 'u32[]', space=smem, size = 0x4, offset = 0x4, fixed_abs, tag = 'smem constant byte address 0x4 - core index']
  #allocation1 [shape = 'u32[144,128]{1,0:T(1,128)}', space=vmem, size = 0x12000, scoped, tag = 'internal scratch']
  %s0 = inlined_call_operand.vmem [shape: s32[4], index: 0, kind: input, shape index: {}]
  %s1 = inlined_call_operand.hbm [shape: f32[32,16], index: 1, kind: input, shape index: {}]
  %s2 = inlined_call_operand.hbm [shape: f32[16,24], index: 2, kind: input, shape index: {}]
  %s3 = inlined_call_operand.vmem [shape: f32[1,24], index: 3, kind: input, shape index: {}]
  %s4 = inlined_call_operand.hbm [shape: f32[24,128], index: 4, kind: input, shape index: {}]
  %s5 = inlined_call_operand.hbm [shape: f32[32,128], index: 5, kind: input, shape index: {}]
  %s6 = inlined_call_operand.vmem [shape: f32[1,128], index: 6, kind: input, shape index: {}]
  %s7 = inlined_call_operand.hbm [shape: f32[32,128], index: 7, kind: input, shape index: {}]
  %s8 = inlined_call_operand.vmem [shape: f32[1,128], index: 8, kind: input, shape index: {}]
  %s9 = inlined_call_operand.hbm [shape: f32[32,128], index: 9, kind: output, shape index: {}]
  %s10 = sld [smem:[#allocation0]]
  $region70: #{lstm_chord_embedding_forward.1} parent=0
    _
  %s12 = ssub.s32 1, %s10
  %s13 = scalar_select 0, %s12, %s10
  $region1: #{lstm_chord_embedding_forward.1} parent=0
    #allocation2 [shape = 'u8[512]{0}', space=smem, size = 0x200, scoped, tag = 'input window, operand 0, single buffered']
    #allocation3 [shape = 's32[1]{0}', space=sflag, size = 0x4, scoped, tag = 'scoped memory for lstm_chord_embedding_forward.1']
    #allocation4 [shape = 's32[1]{0}', space=sflag, size = 0x4, scoped, tag = 'scoped memory for lstm_chord_embedding_forward.1']
    #allocation5 [shape = 's32[1]{0}', space=sflag, size = 0x4, scoped, tag = 'scoped memory for lstm_chord_embedding_forward.1']
    #allocation6 [shape = 'u8[16384]{0}', space=vmem, size = 0x4000, scoped, tag = 'input window, operand 1, single buffered']
    #allocation7 [shape = 'u8[8192]{0}', space=vmem, size = 0x2000, scoped, tag = 'input window, operand 2, single buffered']
    #allocation8 [shape = 's32[1]{0}', space=sflag, size = 0x4, scoped, tag = 'scoped memory for lstm_chord_embedding_forward.1']
    #allocation9 [shape = 'u8[12288]{0}', space=vmem, size = 0x3000, scoped, tag = 'input window, operand 4, single buffered']
    #allocation10 [shape = 'u8[16384]{0}', space=vmem, size = 0x4000, scoped, tag = 'input window, operand 5, single buffered']
    #allocation11 [shape = 's32[1]{0}', space=sflag, size = 0x4, scoped, tag = 'scoped memory for lstm_chord_embedding_forward.1']
    #allocation12 [shape = 'u8[16384]{0}', space=vmem, size = 0x4000, scoped, tag = 'input window, operand 7, single buffered']
    #allocation13 [shape = 'u8[16384]{0}', space=vmem, size = 0x4000, scoped, tag = 'output window, operand 0, single buffered']
    %14 = vsyncpa [#allocation5], 0
    %15 = vsyncpa [#allocation3], 0
    %16 = vsyncpa [#allocation8], 0
    %17 = vsyncpa [#allocation11], 0
    %18 = vsyncpa [#allocation4], 0
    // Predicated region
    $region2: #{lstm_chord_embedding_forward.1} parent=1 // pred_check
      _
    $region3: #{lstm_chord_embedding_forward.1} parent=1 // pred_check_branch
      %20 = sbr.rel (0) target = $region5
    $region4: #{lstm_chord_embedding_forward.1} parent=1 // pred_region
      %s22 = ssub.s32 16, 16
      %23 = vsyncadd [#allocation5], %s22
      %s25 = sshll.u32 %s0, 4
      %s26 = int_to_ptr.vmem [resolvable:$true] %s25
      %28 = dma.vmem_to_smem %s26, 16, [#allocation2], [#allocation5]
    $region5: #{lstm_chord_embedding_forward.1} parent=1 // pred_fallthru
      _
    // Predicated region
    $region6: #{lstm_chord_embedding_forward.1} parent=1 // pred_check
      _
    $region7: #{lstm_chord_embedding_forward.1} parent=1 // pred_check_branch
      %30 = sbr.rel (0) target = $region9
    $region8: #{lstm_chord_embedding_forward.1} parent=1 // pred_region
      %s32 = ssub.s32 512, 512
      %33 = vsyncadd [#allocation3], %s32
      %s34 = sshll.u32 [#allocation6], 4
      %s35 = int_to_ptr.vmem [resolvable:$true] %s34
      %40 = dma.hbm_to_vmem [thread:$0]  %s1, 512, %s35, [#allocation3], 128, 128, 8
    $region9: #{lstm_chord_embedding_forward.1} parent=1 // pred_fallthru
      _
    // Predicated region
    $region10: #{lstm_chord_embedding_forward.1} parent=1 // pred_check
      _
    $region11: #{lstm_chord_embedding_forward.1} parent=1 // pred_check_branch
      %42 = sbr.rel (0) target = $region13
    $region12: #{lstm_chord_embedding_forward.1} parent=1 // pred_region
      %s44 = ssub.s32 256, 256
      %45 = vsyncadd [#allocation8], %s44
      %s46 = sshll.u32 [#allocation7], 4
      %s47 = int_to_ptr.vmem [resolvable:$true] %s46
      %52 = dma.hbm_to_vmem [thread:$0]  %s2, 256, %s47, [#allocation8], 128, 128, 8
    $region13: #{lstm_chord_embedding_forward.1} parent=1 // pred_fallthru
      _
    // Predicated region
    $region14: #{lstm_chord_embedding_forward.1} parent=1 // pred_check
      _
    $region15: #{lstm_chord_embedding_forward.1} parent=1 // pred_check_branch
      %54 = sbr.rel (0) target = $region17
    $region16: #{lstm_chord_embedding_forward.1} parent=1 // pred_region
      _
    $region17: #{lstm_chord_embedding_forward.1} parent=1 // pred_fallthru
      _
    // Predicated region
    $region18: #{lstm_chord_embedding_forward.1} parent=1 // pred_check
      _
    $region19: #{lstm_chord_embedding_forward.1} parent=1 // pred_check_branch
      %56 = sbr.rel (0) target = $region21
    $region20: #{lstm_chord_embedding_forward.1} parent=1 // pred_region
      %s58 = ssub.s32 384, 384
      %59 = vsyncadd [#allocation8], %s58
      %s60 = sshll.u32 [#allocation9], 4
      %s61 = int_to_ptr.vmem [resolvable:$true] %s60
      %66 = dma.hbm_to_vmem [thread:$0]  %s4, 384, %s61, [#allocation8], 128, 128, 8
    $region21: #{lstm_chord_embedding_forward.1} parent=1 // pred_fallthru
      _
    // Predicated region
    $region22: #{lstm_chord_embedding_forward.1} parent=1 // pred_check
      _
    $region23: #{lstm_chord_embedding_forward.1} parent=1 // pred_check_branch
      %68 = sbr.rel (0) target = $region25
    $region24: #{lstm_chord_embedding_forward.1} parent=1 // pred_region
      %s70 = ssub.s32 512, 512
      %71 = vsyncadd [#allocation11], %s70
      %s72 = sshll.u32 [#allocation10], 4
      %s73 = int_to_ptr.vmem [resolvable:$true] %s72
      %78 = dma.hbm_to_vmem [thread:$0]  %s5, 512, %s73, [#allocation11], 128, 128, 8
    $region25: #{lstm_chord_embedding_forward.1} parent=1 // pred_fallthru
      _
    // Predicated region
    $region26: #{lstm_chord_embedding_forward.1} parent=1 // pred_check
      _
    $region27: #{lstm_chord_embedding_forward.1} parent=1 // pred_check_branch
      %80 = sbr.rel (0) target = $region29
    $region28: #{lstm_chord_embedding_forward.1} parent=1 // pred_region
      _
    $region29: #{lstm_chord_embedding_forward.1} parent=1 // pred_fallthru
      _
    // Predicated region
    $region30: #{lstm_chord_embedding_forward.1} parent=1 // pred_check
      _
    $region31: #{lstm_chord_embedding_forward.1} parent=1 // pred_check_branch
      %82 = sbr.rel (0) target = $region33
    $region32: #{lstm_chord_embedding_forward.1} parent=1 // pred_region
      %s84 = ssub.s32 512, 512
      %85 = vsyncadd [#allocation11], %s84
      %s86 = sshll.u32 [#allocation12], 4
      %s87 = int_to_ptr.vmem [resolvable:$true] %s86
      %92 = dma.hbm_to_vmem [thread:$0]  %s7, 512, %s87, [#allocation11], 128, 128, 8
    $region33: #{lstm_chord_embedding_forward.1} parent=1 // pred_fallthru
      _
    // Predicated region
    $region34: #{lstm_chord_embedding_forward.1} parent=1 // pred_check
      _
    $region35: #{lstm_chord_embedding_forward.1} parent=1 // pred_check_branch
      %94 = sbr.rel (0) target = $region37
    $region36: #{lstm_chord_embedding_forward.1} parent=1 // pred_region
      _
    $region37: #{lstm_chord_embedding_forward.1} parent=1 // pred_fallthru
      _
    // Predicated region
    $region38: #{lstm_chord_embedding_forward.1} parent=1 // pred_check
      _
    $region39: #{lstm_chord_embedding_forward.1} parent=1 // pred_check_branch
      %96 = sbr.rel (0) target = $region41
    $region40: #{lstm_chord_embedding_forward.1} parent=1 // pred_region
      %97 = dma.done [#allocation5], 16
    $region41: #{lstm_chord_embedding_forward.1} parent=1 // pred_fallthru
      _
    // Predicated region
    $region42: #{lstm_chord_embedding_forward.1} parent=1 // pred_check
      _
    $region43: #{lstm_chord_embedding_forward.1} parent=1 // pred_check_branch
      %99 = sbr.rel (0) target = $region45
    $region44: #{lstm_chord_embedding_forward.1} parent=1 // pred_region
      %100 = dma.done [#allocation3], 512
    $region45: #{lstm_chord_embedding_forward.1} parent=1 // pred_fallthru
      _
    // Predicated region
    $region46: #{lstm_chord_embedding_forward.1} parent=1 // pred_check
      _
    $region47: #{lstm_chord_embedding_forward.1} parent=1 // pred_check_branch
      %102 = sbr.rel (0) target = $region49
    $region48: #{lstm_chord_embedding_forward.1} parent=1 // pred_region
      %103 = dma.done [#allocation8], 256
    $region49: #{lstm_chord_embedding_forward.1} parent=1 // pred_fallthru
      _
    // Predicated region
    $region50: #{lstm_chord_embedding_forward.1} parent=1 // pred_check
      _
    $region51: #{lstm_chord_embedding_forward.1} parent=1 // pred_check_branch
      %105 = sbr.rel (0) target = $region53
    $region52: #{lstm_chord_embedding_forward.1} parent=1 // pred_region
      %106 = dma.done [#allocation8], 384
    $region53: #{lstm_chord_embedding_forward.1} parent=1 // pred_fallthru
      _
    // Predicated region
    $region54: #{lstm_chord_embedding_forward.1} parent=1 // pred_check
      _
    $region55: #{lstm_chord_embedding_forward.1} parent=1 // pred_check_branch
      %108 = sbr.rel (0) target = $region57
    $region56: #{lstm_chord_embedding_forward.1} parent=1 // pred_region
      %109 = dma.done [#allocation11], 512
    $region57: #{lstm_chord_embedding_forward.1} parent=1 // pred_fallthru
      _
    // Predicated region
    $region58: #{lstm_chord_embedding_forward.1} parent=1 // pred_check
      _
    $region59: #{lstm_chord_embedding_forward.1} parent=1 // pred_check_branch
      %111 = sbr.rel (0) target = $region61
    $region60: #{lstm_chord_embedding_forward.1} parent=1 // pred_region
      %112 = dma.done [#allocation11], 512
    $region61: #{lstm_chord_embedding_forward.1} parent=1 // pred_fallthru
      _
    %113 = sfence
    %v114 = vld [vmem:[#allocation6] sm:$0xff]
    %v115 = vld [vmem:[#allocation6 + $0x8] sm:$0xff]
    %v116 = vld [vmem:[#allocation6 + $0x10] sm:$0xff]
    %v117 = vld [vmem:[#allocation6 + $0x18] sm:$0xff]
    %v118 = vld [vmem:[#allocation7] sm:$0xff]
    %v119 = vld [vmem:[#allocation7 + $0x8] sm:$0xff]
    %v120 = vld [vmem:[%s3] sm:$0x1]
    %v122 = vlaneseq
    %v123 = vshrl.u32 %v122, 7
    %v124 = vsub.s32 0, %v123
    %v125 = vrot.slane %v120, %v124
    %vm127 = vcmask 130048
    %v129 = vsel %vm127, %v114, 0
    %v132 = vsel %vm127, %v115, 0
    %v135 = vsel %vm127, %v116, 0
    %v138 = vsel %vm127, %v117, 0
    %140 = vmatprep.subr.mxu0 0.0
    %141 = vmatpush1.msra.mxu0 0.0
    %142 = vmatprep.subr.mxu0 0.0
    %143 = vmatpush1.msra.mxu0 0.0
    %144 = vmatprep.subr.mxu0 0.0
    %145 = vmatpush1.msra.mxu0 0.0
    %146 = vmatprep.subr.mxu0 0.0
    %147 = vmatpush1.msra.mxu0 0.0
    %148 = vmatprep.subr.mxu0 0.0
    %149 = vmatpush1.msra.mxu0 0.0
    %150 = vmatprep.subr.mxu0 0.0
    %151 = vmatpush1.msra.mxu0 0.0
    %152 = vmatprep.subr.mxu0 0.0
    %153 = vmatpush1.msra.mxu0 0.0
    %154 = vmatprep.subr.mxu0 0.0
    %155 = vmatpush1.msra.mxu0 0.0
    %156 = vmatprep.subr.mxu0 0.0
    %157 = vmatpush1.msra.mxu0 0.0
    %158 = vmatprep.subr.mxu0 0.0
    %159 = vmatpush1.msra.mxu0 0.0
    %160 = vmatprep.subr.mxu0 0.0
    %161 = vmatpush1.msra.mxu0 0.0
    %162 = vmatprep.subr.mxu0 0.0
    %163 = vmatpush1.msra.mxu0 0.0
    %164 = vmatprep.subr.mxu0 0.0
    %165 = vmatpush1.msra.mxu0 0.0
    %166 = vmatprep.subr.mxu0 0.0
    %167 = vmatpush1.msra.mxu0 0.0
    %168 = vmatprep.subr.mxu0 0.0
    %169 = vmatpush1.msra.mxu0 %v119
    %170 = vmatprep.subr.mxu0 0.0
    %171 = vmatpush1.msra.mxu0 %v118
    %172 = vmatprep.subr.mxu0 0.0
    %173 = vmatpush2.msra.mxu0 0.0
    %174 = vmatprep.subr.mxu0 0.0
    %175 = vmatpush2.msra.mxu0 0.0
    %176 = vmatprep.subr.mxu0 0.0
    %177 = vmatpush2.msra.mxu0 0.0
    %178 = vmatprep.subr.mxu0 0.0
    %179 = vmatpush2.msra.mxu0 0.0
    %180 = vmatprep.subr.mxu0 0.0
    %181 = vmatpush2.msra.mxu0 0.0
    %182 = vmatprep.subr.mxu0 0.0
    %183 = vmatpush2.msra.mxu0 0.0
    %184 = vmatprep.subr.mxu0 0.0
    %185 = vmatpush2.msra.mxu0 0.0
    %186 = vmatprep.subr.mxu0 0.0
    %187 = vmatpush2.msra.mxu0 0.0
    %188 = vmatprep.subr.mxu0 0.0
    %189 = vmatpush2.msra.mxu0 0.0
    %190 = vmatprep.subr.mxu0 0.0
    %191 = vmatpush2.msra.mxu0 0.0
    %192 = vmatprep.subr.mxu0 0.0
    %193 = vmatpush2.msra.mxu0 0.0
    %194 = vmatprep.subr.mxu0 0.0
    %195 = vmatpush2.msra.mxu0 0.0
    %196 = vmatprep.subr.mxu0 0.0
    %197 = vmatpush2.msra.mxu0 0.0
    %198 = vmatprep.subr.mxu0 0.0
    %199 = vmatpush2.msra.mxu0 0.0
    %200 = vmatprep.subr.mxu0 0.0
    %201 = vmatpush2.msra.mxu0 0.0
    %202 = vmatprep.subr.mxu0 0.0
    %203 = vmatpush2.msra.mxu0 0.0
    %204 = vmatprep.mubr.f32.mxu0 0.0
    %205 = vmatmul.mubr.f32.gmra.mxu0 %v129
    %v206 = vpop.f32.mrf.mxu0
    %v207 = vadd.f32 %v125, %v206
    %v208 = vpop.f32.mrf.mxu0
    %209 = vmatprep.mubr.f32.mxu0 0.0
    %210 = vmatmul.mubr.f32.gmra.mxu0 %v132
    %v211 = vpop.f32.mrf.mxu0
    %v212 = vadd.f32 %v125, %v211
    %v213 = vpop.f32.mrf.mxu0
    %214 = vmatprep.mubr.f32.mxu0 0.0
    %215 = vmatmul.mubr.f32.gmra.mxu0 %v135
    %v216 = vpop.f32.mrf.mxu0
    %v217 = vadd.f32 %v125, %v216
    %v218 = vpop.f32.mrf.mxu0
    %219 = vmatprep.mubr.f32.mxu0 0.0
    %220 = vmatmul.mubr.f32.gmra.mxu0 %v138
    %v221 = vpop.f32.mrf.mxu0
    %v222 = vadd.f32 %v125, %v221
    %v223 = vpop.f32.mrf.mxu0
    %224 = vdwg.mxu0
    %v225 = vmax.f32 %v207, 0.0
    %v226 = vmax.f32 %v212, 0.0
    %v227 = vmax.f32 %v217, 0.0
    %v228 = vmax.f32 %v222, 0.0
    %v229 = vld [vmem:[#allocation9] sm:$0xff]
    %v230 = vld [vmem:[#allocation9 + $0x8] sm:$0xff]
    %v231 = vld [vmem:[#allocation9 + $0x10] sm:$0xff]
    %v232 = vld [vmem:[%s6] sm:$0x1]
    %v234 = vlaneseq
    %v235 = vshrl.u32 %v234, 7
    %v236 = vsub.s32 0, %v235
    %v237 = vrot.slane %v232, %v236
    %vm239 = vcmask 195584
    %v241 = vsel %vm239, %v225, 0
    %v244 = vsel %vm239, %v226, 0
    %v247 = vsel %vm239, %v227, 0
    %v250 = vsel %vm239, %v228, 0
    %252 = vmatprep.subr.mxu0 0.0
    %253 = vmatpush1.msra.mxu0 0.0
    %254 = vmatprep.subr.mxu0 0.0
    %255 = vmatpush1.msra.mxu0 0.0
    %256 = vmatprep.subr.mxu0 0.0
    %257 = vmatpush1.msra.mxu0 0.0
    %258 = vmatprep.subr.mxu0 0.0
    %259 = vmatpush1.msra.mxu0 0.0
    %260 = vmatprep.subr.mxu0 0.0
    %261 = vmatpush1.msra.mxu0 0.0
    %262 = vmatprep.subr.mxu0 0.0
    %263 = vmatpush1.msra.mxu0 0.0
    %264 = vmatprep.subr.mxu0 0.0
    %265 = vmatpush1.msra.mxu0 0.0
    %266 = vmatprep.subr.mxu0 0.0
    %267 = vmatpush1.msra.mxu0 0.0
    %268 = vmatprep.subr.mxu0 0.0
    %269 = vmatpush1.msra.mxu0 0.0
    %270 = vmatprep.subr.mxu0 0.0
    %271 = vmatpush1.msra.mxu0 0.0
    %272 = vmatprep.subr.mxu0 0.0
    %273 = vmatpush1.msra.mxu0 0.0
    %274 = vmatprep.subr.mxu0 0.0
    %275 = vmatpush1.msra.mxu0 0.0
    %276 = vmatprep.subr.mxu0 0.0
    %277 = vmatpush1.msra.mxu0 0.0
    %278 = vmatprep.subr.mxu0 0.0
    %279 = vmatpush1.msra.mxu0 %v231
    %280 = vmatprep.subr.mxu0 0.0
    %281 = vmatpush1.msra.mxu0 %v230
    %282 = vmatprep.subr.mxu0 0.0
    %283 = vmatpush1.msra.mxu0 %v229
    %284 = vmatprep.subr.mxu0 0.0
    %285 = vmatpush2.msra.mxu0 0.0
    %286 = vmatprep.subr.mxu0 0.0
    %287 = vmatpush2.msra.mxu0 0.0
    %288 = vmatprep.subr.mxu0 0.0
    %289 = vmatpush2.msra.mxu0 0.0
    %290 = vmatprep.subr.mxu0 0.0
    %291 = vmatpush2.msra.mxu0 0.0
    %292 = vmatprep.subr.mxu0 0.0
    %293 = vmatpush2.msra.mxu0 0.0
    %294 = vmatprep.subr.mxu0 0.0
    %295 = vmatpush2.msra.mxu0 0.0
    %296 = vmatprep.subr.mxu0 0.0
    %297 = vmatpush2.msra.mxu0 0.0
    %298 = vmatprep.subr.mxu0 0.0
    %299 = vmatpush2.msra.mxu0 0.0
    %300 = vmatprep.subr.mxu0 0.0
    %301 = vmatpush2.msra.mxu0 0.0
    %302 = vmatprep.subr.mxu0 0.0
    %303 = vmatpush2.msra.mxu0 0.0
    %304 = vmatprep.subr.mxu0 0.0
    %305 = vmatpush2.msra.mxu0 0.0
    %306 = vmatprep.subr.mxu0 0.0
    %307 = vmatpush2.msra.mxu0 0.0
    %308 = vmatprep.subr.mxu0 0.0
    %309 = vmatpush2.msra.mxu0 0.0
    %310 = vmatprep.subr.mxu0 0.0
    %311 = vmatpush2.msra.mxu0 0.0
    %312 = vmatprep.subr.mxu0 0.0
    %313 = vmatpush2.msra.mxu0 0.0
    %314 = vmatprep.subr.mxu0 0.0
    %315 = vmatpush2.msra.mxu0 0.0
    %316 = vmatprep.mubr.f32.mxu0 0.0
    %317 = vmatmul.mubr.f32.gmra.mxu0 %v241
    %v318 = vpop.f32.mrf.mxu0
    %v319 = vadd.f32 %v237, %v318
    %v320 = vpop.f32.mrf.mxu0
    %321 = vmatprep.mubr.f32.mxu0 0.0
    %322 = vmatmul.mubr.f32.gmra.mxu0 %v244
    %v323 = vpop.f32.mrf.mxu0
    %v324 = vadd.f32 %v237, %v323
    %v325 = vpop.f32.mrf.mxu0
    %326 = vmatprep.mubr.f32.mxu0 0.0
    %327 = vmatmul.mubr.f32.gmra.mxu0 %v247
    %v328 = vpop.f32.mrf.mxu0
    %v329 = vadd.f32 %v237, %v328
    %v330 = vpop.f32.mrf.mxu0
    %331 = vmatprep.mubr.f32.mxu0 0.0
    %332 = vmatmul.mubr.f32.gmra.mxu0 %v250
    %v333 = vpop.f32.mrf.mxu0
    %v334 = vadd.f32 %v237, %v333
    %v335 = vpop.f32.mrf.mxu0
    %336 = vdwg.mxu0
    %v337 = vld [vmem:[#allocation10] sm:$0xff]
    %v338 = vld [vmem:[#allocation10 + $0x8] sm:$0xff]
    %v339 = vld [vmem:[#allocation10 + $0x10] sm:$0xff]
    %v340 = vld [vmem:[#allocation10 + $0x18] sm:$0xff]
    %vm341 = vcmask 261120
    %v343 = vsel %vm341, 0.0, 0
    %345 = vmatprep.subr.mxu0 0.0
    %346 = vmatpush1.msra.mxu0 0.0
    %347 = vmatprep.subr.mxu0 0.0
    %348 = vmatpush1.msra.mxu0 0.0
    %349 = vmatprep.subr.mxu0 0.0
    %350 = vmatpush1.msra.mxu0 0.0
    %351 = vmatprep.subr.mxu0 0.0
    %352 = vmatpush1.msra.mxu0 0.0
    %353 = vmatprep.subr.mxu0 0.0
    %354 = vmatpush1.msra.mxu0 0.0
    %355 = vmatprep.subr.mxu0 0.0
    %356 = vmatpush1.msra.mxu0 0.0
    %357 = vmatprep.subr.mxu0 0.0
    %358 = vmatpush1.msra.mxu0 0.0
    %359 = vmatprep.subr.mxu0 0.0
    %360 = vmatpush1.msra.mxu0 0.0
    %361 = vmatprep.subr.mxu0 0.0
    %362 = vmatpush1.msra.mxu0 0.0
    %363 = vmatprep.subr.mxu0 0.0
    %364 = vmatpush1.msra.mxu0 0.0
    %365 = vmatprep.subr.mxu0 0.0
    %366 = vmatpush1.msra.mxu0 0.0
    %367 = vmatprep.subr.mxu0 0.0
    %368 = vmatpush1.msra.mxu0 0.0
    %369 = vmatprep.subr.mxu0 0.0
    %370 = vmatpush1.msra.mxu0 %v340
    %371 = vmatprep.subr.mxu0 0.0
    %372 = vmatpush1.msra.mxu0 %v339
    %373 = vmatprep.subr.mxu0 0.0
    %374 = vmatpush1.msra.mxu0 %v338
    %375 = vmatprep.subr.mxu0 0.0
    %376 = vmatpush1.msra.mxu0 %v337
    %377 = vmatprep.subr.mxu0 0.0
    %378 = vmatpush2.msra.mxu0 0.0
    %379 = vmatprep.subr.mxu0 0.0
    %380 = vmatpush2.msra.mxu0 0.0
    %381 = vmatprep.subr.mxu0 0.0
    %382 = vmatpush2.msra.mxu0 0.0
    %383 = vmatprep.subr.mxu0 0.0
    %384 = vmatpush2.msra.mxu0 0.0
    %385 = vmatprep.subr.mxu0 0.0
    %386 = vmatpush2.msra.mxu0 0.0
    %387 = vmatprep.subr.mxu0 0.0
    %388 = vmatpush2.msra.mxu0 0.0
    %389 = vmatprep.subr.mxu0 0.0
    %390 = vmatpush2.msra.mxu0 0.0
    %391 = vmatprep.subr.mxu0 0.0
    %392 = vmatpush2.msra.mxu0 0.0
    %393 = vmatprep.subr.mxu0 0.0
    %394 = vmatpush2.msra.mxu0 0.0
    %395 = vmatprep.subr.mxu0 0.0
    %396 = vmatpush2.msra.mxu0 0.0
    %397 = vmatprep.subr.mxu0 0.0
    %398 = vmatpush2.msra.mxu0 0.0
    %399 = vmatprep.subr.mxu0 0.0
    %400 = vmatpush2.msra.mxu0 0.0
    %401 = vmatprep.subr.mxu0 0.0
    %402 = vmatpush2.msra.mxu0 0.0
    %403 = vmatprep.subr.mxu0 0.0
    %404 = vmatpush2.msra.mxu0 0.0
    %405 = vmatprep.subr.mxu0 0.0
    %406 = vmatpush2.msra.mxu0 0.0
    %407 = vmatprep.subr.mxu0 0.0
    %408 = vmatpush2.msra.mxu0 0.0
    %409 = vmatprep.mubr.f32.mxu0 0.0
    %410 = vmatmul.mubr.f32.gmra.mxu0 %v343
    %v411 = vpop.f32.mrf.mxu0
    %v412 = vadd.f32 0.0, %v411
    %v413 = vpop.f32.mrf.mxu0
    %414 = vdwg.mxu0
    %v416 = vrot.slane %v412, 1
    %v417 = vrot.slane %v412, 2
    %v418 = vrot.slane %v412, 3
    %v423 = vadd.f32 %v319, %v412
    %v424 = vadd.f32 %v324, %v416
    %v425 = vadd.f32 %v329, %v417
    %v426 = vadd.f32 %v334, %v418
    %v427 = vxor.u32 %v423, 2147483648
    %v428 = vxor.u32 %v424, 2147483648
    %v429 = vxor.u32 %v425, 2147483648
    %v430 = vxor.u32 %v426, 2147483648
    %v431 = vmul.f32 %v427, 1.442695
    %v432 = vpow.pop %v431
    %v433 = vmul.f32 %v428, 1.442695
    %v434 = vpow.pop %v433
    %v435 = vmul.f32 %v429, 1.442695
    %v436 = vpow.pop %v435
    %v437 = vmul.f32 %v430, 1.442695
    %v438 = vpow.pop %v437
    %v439 = vadd.f32 %v432, 1.0
    %v440 = vadd.f32 %v434, 1.0
    %v441 = vadd.f32 %v436, 1.0
    %v442 = vadd.f32 %v438, 1.0
    %v443 = vrcp.pop %v439
    %v444 = vmul.f32 1.0, %v443
    %v445 = vrcp.pop %v440
    %v446 = vmul.f32 1.0, %v445
    %v447 = vrcp.pop %v441
    %v448 = vmul.f32 1.0, %v447
    %v449 = vrcp.pop %v442
    %v450 = vmul.f32 1.0, %v449
    %v451 = vtanh.pop %v423
    %v452 = vtanh.pop %v424
    %v453 = vtanh.pop %v425
    %v454 = vtanh.pop %v426
    %v455 = vmul.f32 %v444, 0.0
    %v456 = vmul.f32 %v446, 0.0
    %v457 = vmul.f32 %v448, 0.0
    %v458 = vmul.f32 %v450, 0.0
    %463 = vrot.lane.b32.xlu0 %v451, 64
    %v464 = vpop.permute.xlu0 %463
    %465 = vrot.lane.b32.xlu0 %v452, 64
    %v466 = vpop.permute.xlu0 %465
    %467 = vrot.lane.b32.xlu0 %v453, 64
    %v468 = vpop.permute.xlu0 %467
    %469 = vrot.lane.b32.xlu0 %v454, 64
    %v470 = vpop.permute.xlu0 %469
    %v475 = vmul.f32 %v444, %v464
    %v476 = vmul.f32 %v446, %v466
    %v477 = vmul.f32 %v448, %v468
    %v478 = vmul.f32 %v450, %v470
    %483 = vrot.lane.b32.xlu0 %v475, 32
    %v484 = vpop.permute.xlu0 %483
    %485 = vrot.lane.b32.xlu0 %v476, 32
    %v486 = vpop.permute.xlu0 %485
    %487 = vrot.lane.b32.xlu0 %v477, 32
    %v488 = vpop.permute.xlu0 %487
    %489 = vrot.lane.b32.xlu0 %v478, 32
    %v490 = vpop.permute.xlu0 %489
    %v495 = vadd.f32 %v455, %v484
    %v496 = vadd.f32 %v456, %v486
    %v497 = vadd.f32 %v457, %v488
    %v498 = vadd.f32 %v458, %v490
    %v499 = vtanh.pop %v495
    %v500 = vtanh.pop %v496
    %v501 = vtanh.pop %v497
    %v502 = vtanh.pop %v498
    %507 = vrot.lane.b32.xlu0 %v499, 64
    %v508 = vpop.permute.xlu0 %507
    %509 = vrot.lane.b32.xlu0 %v500, 64
    %v510 = vpop.permute.xlu0 %509
    %511 = vrot.lane.b32.xlu0 %v501, 64
    %v512 = vpop.permute.xlu0 %511
    %513 = vrot.lane.b32.xlu0 %v502, 64
    %v514 = vpop.permute.xlu0 %513
    %v519 = vmul.f32 %v444, %v508
    %v520 = vmul.f32 %v446, %v510
    %v521 = vmul.f32 %v448, %v512
    %v522 = vmul.f32 %v450, %v514
    %v527 = vrot.slane %v520, 7
    %vm528 = vcmask 1041409
    %v529 = vsel %vm528, %v527, %v519
    %v530 = vrot.slane %v521, 6
    %vm531 = vcmask 1042434
    %v532 = vsel %vm531, %v530, %v529
    %v533 = vrot.slane %v522, 5
    %vm534 = vcmask 1043459
    %v535 = vsel %vm534, %v533, %v532
    %536 = vrot.lane.b32.xlu0 %v535, 32
    %v537 = vpop.permute.xlu0 %536
    %v538 = vsel %vm341, %v537, 0
    %540 = vmatprep.subr.mxu0 0.0
    %541 = vmatpush1.msra.mxu0 0.0
    %542 = vmatprep.subr.mxu0 0.0
    %543 = vmatpush1.msra.mxu0 0.0
    %544 = vmatprep.subr.mxu0 0.0
    %545 = vmatpush1.msra.mxu0 0.0
    %546 = vmatprep.subr.mxu0 0.0
    %547 = vmatpush1.msra.mxu0 0.0
    %548 = vmatprep.subr.mxu0 0.0
    %549 = vmatpush1.msra.mxu0 0.0
    %550 = vmatprep.subr.mxu0 0.0
    %551 = vmatpush1.msra.mxu0 0.0
    %552 = vmatprep.subr.mxu0 0.0
    %553 = vmatpush1.msra.mxu0 0.0
    %554 = vmatprep.subr.mxu0 0.0
    %555 = vmatpush1.msra.mxu0 0.0
    %556 = vmatprep.subr.mxu0 0.0
    %557 = vmatpush1.msra.mxu0 0.0
    %558 = vmatprep.subr.mxu0 0.0
    %559 = vmatpush1.msra.mxu0 0.0
    %560 = vmatprep.subr.mxu0 0.0
    %561 = vmatpush1.msra.mxu0 0.0
    %562 = vmatprep.subr.mxu0 0.0
    %563 = vmatpush1.msra.mxu0 0.0
    %564 = vmatprep.subr.mxu0 0.0
    %565 = vmatpush1.msra.mxu0 %v340
    %566 = vmatprep.subr.mxu0 0.0
    %567 = vmatpush1.msra.mxu0 %v339
    %568 = vmatprep.subr.mxu0 0.0
    %569 = vmatpush1.msra.mxu0 %v338
    %570 = vmatprep.subr.mxu0 0.0
    %571 = vmatpush1.msra.mxu0 %v337
    %572 = vmatprep.subr.mxu0 0.0
    %573 = vmatpush2.msra.mxu0 0.0
    %574 = vmatprep.subr.mxu0 0.0
    %575 = vmatpush2.msra.mxu0 0.0
    %576 = vmatprep.subr.mxu0 0.0
    %577 = vmatpush2.msra.mxu0 0.0
    %578 = vmatprep.subr.mxu0 0.0
    %579 = vmatpush2.msra.mxu0 0.0
    %580 = vmatprep.subr.mxu0 0.0
    %581 = vmatpush2.msra.mxu0 0.0
    %582 = vmatprep.subr.mxu0 0.0
    %583 = vmatpush2.msra.mxu0 0.0
    %584 = vmatprep.subr.mxu0 0.0
    %585 = vmatpush2.msra.mxu0 0.0
    %586 = vmatprep.subr.mxu0 0.0
    %587 = vmatpush2.msra.mxu0 0.0
    %588 = vmatprep.subr.mxu0 0.0
    %589 = vmatpush2.msra.mxu0 0.0
    %590 = vmatprep.subr.mxu0 0.0
    %591 = vmatpush2.msra.mxu0 0.0
    %592 = vmatprep.subr.mxu0 0.0
    %593 = vmatpush2.msra.mxu0 0.0
    %594 = vmatprep.subr.mxu0 0.0
    %595 = vmatpush2.msra.mxu0 0.0
    %596 = vmatprep.subr.mxu0 0.0
    %597 = vmatpush2.msra.mxu0 0.0
    %598 = vmatprep.subr.mxu0 0.0
    %599 = vmatpush2.msra.mxu0 0.0
    %600 = vmatprep.subr.mxu0 0.0
    %601 = vmatpush2.msra.mxu0 0.0
    %602 = vmatprep.subr.mxu0 0.0
    %603 = vmatpush2.msra.mxu0 0.0
    %604 = vmatprep.mubr.f32.mxu0 0.0
    %605 = vmatmul.mubr.f32.gmra.mxu0 %v538
    %v606 = vpop.f32.mrf.mxu0
    %v607 = vadd.f32 0.0, %v606
    %v608 = vpop.f32.mrf.mxu0
    %609 = vdwg.mxu0
    %v611 = vrot.slane %v607, 7
    %v612 = vrot.slane %v607, 1
    %v613 = vrot.slane %v607, 2
    %v618 = vadd.f32 %v319, %v611
    %v619 = vadd.f32 %v324, %v607
    %v620 = vadd.f32 %v329, %v612
    %v621 = vadd.f32 %v334, %v613
    %v622 = vxor.u32 %v618, 2147483648
    %v623 = vxor.u32 %v619, 2147483648
    %v624 = vxor.u32 %v620, 2147483648
    %v625 = vxor.u32 %v621, 2147483648
    %v626 = vmul.f32 %v622, 1.442695
    %v627 = vpow.pop %v626
    %v628 = vmul.f32 %v623, 1.442695
    %v629 = vpow.pop %v628
    %v630 = vmul.f32 %v624, 1.442695
    %v631 = vpow.pop %v630
    %v632 = vmul.f32 %v625, 1.442695
    %v633 = vpow.pop %v632
    %v634 = vadd.f32 %v627, 1.0
    %v635 = vadd.f32 %v629, 1.0
    %v636 = vadd.f32 %v631, 1.0
    %v637 = vadd.f32 %v633, 1.0
    %v638 = vrcp.pop %v634
    %v639 = vmul.f32 1.0, %v638
    %v640 = vrcp.pop %v635
    %v641 = vmul.f32 1.0, %v640
    %v642 = vrcp.pop %v636
    %v643 = vmul.f32 1.0, %v642
    %v644 = vrcp.pop %v637
    %v645 = vmul.f32 1.0, %v644
    %v646 = vtanh.pop %v618
    %v647 = vtanh.pop %v619
    %v648 = vtanh.pop %v620
    %v649 = vtanh.pop %v621
    %v654 = vrot.slane %v495, 7
    %v655 = vrot.slane %v496, 7
    %v656 = vrot.slane %v497, 7
    %v657 = vrot.slane %v498, 7
    %v662 = vmul.f32 %v639, %v654
    %v663 = vmul.f32 %v641, %v655
    %v664 = vmul.f32 %v643, %v656
    %v665 = vmul.f32 %v645, %v657
    %670 = vrot.lane.b32.xlu0 %v646, 64
    %v671 = vpop.permute.xlu0 %670
    %672 = vrot.lane.b32.xlu0 %v647, 64
    %v673 = vpop.permute.xlu0 %672
    %674 = vrot.lane.b32.xlu0 %v648, 64
    %v675 = vpop.permute.xlu0 %674
    %676 = vrot.lane.b32.xlu0 %v649, 64
    %v677 = vpop.permute.xlu0 %676
    %v682 = vmul.f32 %v639, %v671
    %v683 = vmul.f32 %v641, %v673
    %v684 = vmul.f32 %v643, %v675
    %v685 = vmul.f32 %v645, %v677
    %690 = vrot.lane.b32.xlu0 %v682, 32
    %v691 = vpop.permute.xlu0 %690
    %692 = vrot.lane.b32.xlu0 %v683, 32
    %v693 = vpop.permute.xlu0 %692
    %694 = vrot.lane.b32.xlu0 %v684, 32
    %v695 = vpop.permute.xlu0 %694
    %696 = vrot.lane.b32.xlu0 %v685, 32
    %v697 = vpop.permute.xlu0 %696
    %v702 = vadd.f32 %v662, %v691
    %v703 = vadd.f32 %v663, %v693
    %v704 = vadd.f32 %v664, %v695
    %v705 = vadd.f32 %v665, %v697
    %v706 = vtanh.pop %v702
    %v707 = vtanh.pop %v703
    %v708 = vtanh.pop %v704
    %v709 = vtanh.pop %v705
    %714 = vrot.lane.b32.xlu0 %v706, 64
    %v715 = vpop.permute.xlu0 %714
    %716 = vrot.lane.b32.xlu0 %v707, 64
    %v717 = vpop.permute.xlu0 %716
    %718 = vrot.lane.b32.xlu0 %v708, 64
    %v719 = vpop.permute.xlu0 %718
    %720 = vrot.lane.b32.xlu0 %v709, 64
    %v721 = vpop.permute.xlu0 %720
    %v726 = vmul.f32 %v639, %v715
    %v727 = vmul.f32 %v641, %v717
    %v728 = vmul.f32 %v643, %v719
    %v729 = vmul.f32 %v645, %v721
    %v734 = vrot.slane %v726, 1
    %v735 = vsel %vm528, %v727, %v734
    %v736 = vrot.slane %v728, 7
    %v737 = vsel %vm531, %v736, %v735
    %v738 = vrot.slane %v729, 6
    %v739 = vsel %vm534, %v738, %v737
    %740 = vrot.lane.b32.xlu0 %v739, 32
    %v741 = vpop.permute.xlu0 %740
    %v742 = vsel %vm341, %v741, 0
    %744 = vmatprep.subr.mxu0 0.0
    %745 = vmatpush1.msra.mxu0 0.0
    %746 = vmatprep.subr.mxu0 0.0
    %747 = vmatpush1.msra.mxu0 0.0
    %748 = vmatprep.subr.mxu0 0.0
    %749 = vmatpush1.msra.mxu0 0.0
    %750 = vmatprep.subr.mxu0 0.0
    %751 = vmatpush1.msra.mxu0 0.0
    %752 = vmatprep.subr.mxu0 0.0
    %753 = vmatpush1.msra.mxu0 0.0
    %754 = vmatprep.subr.mxu0 0.0
    %755 = vmatpush1.msra.mxu0 0.0
    %756 = vmatprep.subr.mxu0 0.0
    %757 = vmatpush1.msra.mxu0 0.0
    %758 = vmatprep.subr.mxu0 0.0
    %759 = vmatpush1.msra.mxu0 0.0
    %760 = vmatprep.subr.mxu0 0.0
    %761 = vmatpush1.msra.mxu0 0.0
    %762 = vmatprep.subr.mxu0 0.0
    %763 = vmatpush1.msra.mxu0 0.0
    %764 = vmatprep.subr.mxu0 0.0
    %765 = vmatpush1.msra.mxu0 0.0
    %766 = vmatprep.subr.mxu0 0.0
    %767 = vmatpush1.msra.mxu0 0.0
    %768 = vmatprep.subr.mxu0 0.0
    %769 = vmatpush1.msra.mxu0 %v340
    %770 = vmatprep.subr.mxu0 0.0
    %771 = vmatpush1.msra.mxu0 %v339
    %772 = vmatprep.subr.mxu0 0.0
    %773 = vmatpush1.msra.mxu0 %v338
    %774 = vmatprep.subr.mxu0 0.0
    %775 = vmatpush1.msra.mxu0 %v337
    %776 = vmatprep.subr.mxu0 0.0
    %777 = vmatpush2.msra.mxu0 0.0
    %778 = vmatprep.subr.mxu0 0.0
    %779 = vmatpush2.msra.mxu0 0.0
    %780 = vmatprep.subr.mxu0 0.0
    %781 = vmatpush2.msra.mxu0 0.0
    %782 = vmatprep.subr.mxu0 0.0
    %783 = vmatpush2.msra.mxu0 0.0
    %784 = vmatprep.subr.mxu0 0.0
    %785 = vmatpush2.msra.mxu0 0.0
    %786 = vmatprep.subr.mxu0 0.0
    %787 = vmatpush2.msra.mxu0 0.0
    %788 = vmatprep.subr.mxu0 0.0
    %789 = vmatpush2.msra.mxu0 0.0
    %790 = vmatprep.subr.mxu0 0.0
    %791 = vmatpush2.msra.mxu0 0.0
    %792 = vmatprep.subr.mxu0 0.0
    %793 = vmatpush2.msra.mxu0 0.0
    %794 = vmatprep.subr.mxu0 0.0
    %795 = vmatpush2.msra.mxu0 0.0
    %796 = vmatprep.subr.mxu0 0.0
    %797 = vmatpush2.msra.mxu0 0.0
    %798 = vmatprep.subr.mxu0 0.0
    %799 = vmatpush2.msra.mxu0 0.0
    %800 = vmatprep.subr.mxu0 0.0
    %801 = vmatpush2.msra.mxu0 0.0
    %802 = vmatprep.subr.mxu0 0.0
    %803 = vmatpush2.msra.mxu0 0.0
    %804 = vmatprep.subr.mxu0 0.0
    %805 = vmatpush2.msra.mxu0 0.0
    %806 = vmatprep.subr.mxu0 0.0
    %807 = vmatpush2.msra.mxu0 0.0
    %808 = vmatprep.mubr.f32.mxu0 0.0
    %809 = vmatmul.mubr.f32.gmra.mxu0 %v742
    %v810 = vpop.f32.mrf.mxu0
    %v811 = vadd.f32 0.0, %v810
    %v812 = vpop.f32.mrf.mxu0
    %813 = vdwg.mxu0
    %v815 = vrot.slane %v811, 6
    %v816 = vrot.slane %v811, 7
    %v817 = vrot.slane %v811, 1
    %v822 = vadd.f32 %v319, %v815
    %v823 = vadd.f32 %v324, %v816
    %v824 = vadd.f32 %v329, %v811
    %v825 = vadd.f32 %v334, %v817
    %v826 = vxor.u32 %v822, 2147483648
    %v827 = vxor.u32 %v823, 2147483648
    %v828 = vxor.u32 %v824, 2147483648
    %v829 = vxor.u32 %v825, 2147483648
    %v830 = vmul.f32 %v826, 1.442695
    %v831 = vpow.pop %v830
    %v832 = vmul.f32 %v827, 1.442695
    %v833 = vpow.pop %v832
    %v834 = vmul.f32 %v828, 1.442695
    %v835 = vpow.pop %v834
    %v836 = vmul.f32 %v829, 1.442695
    %v837 = vpow.pop %v836
    %v838 = vadd.f32 %v831, 1.0
    %v839 = vadd.f32 %v833, 1.0
    %v840 = vadd.f32 %v835, 1.0
    %v841 = vadd.f32 %v837, 1.0
    %v842 = vrcp.pop %v838
    %v843 = vmul.f32 1.0, %v842
    %v844 = vrcp.pop %v839
    %v845 = vmul.f32 1.0, %v844
    %v846 = vrcp.pop %v840
    %v847 = vmul.f32 1.0, %v846
    %v848 = vrcp.pop %v841
    %v849 = vmul.f32 1.0, %v848
    %v850 = vtanh.pop %v822
    %v851 = vtanh.pop %v823
    %v852 = vtanh.pop %v824
    %v853 = vtanh.pop %v825
    %v858 = vrot.slane %v702, 7
    %v859 = vrot.slane %v703, 7
    %v860 = vrot.slane %v704, 7
    %v861 = vrot.slane %v705, 7
    %v866 = vmul.f32 %v843, %v858
    %v867 = vmul.f32 %v845, %v859
    %v868 = vmul.f32 %v847, %v860
    %v869 = vmul.f32 %v849, %v861
    %874 = vrot.lane.b32.xlu0 %v850, 64
    %v875 = vpop.permute.xlu0 %874
    %876 = vrot.lane.b32.xlu0 %v851, 64
    %v877 = vpop.permute.xlu0 %876
    %878 = vrot.lane.b32.xlu0 %v852, 64
    %v879 = vpop.permute.xlu0 %878
    %880 = vrot.lane.b32.xlu0 %v853, 64
    %v881 = vpop.permute.xlu0 %880
    %v886 = vmul.f32 %v843, %v875
    %v887 = vmul.f32 %v845, %v877
    %v888 = vmul.f32 %v847, %v879
    %v889 = vmul.f32 %v849, %v881
    %894 = vrot.lane.b32.xlu0 %v886, 32
    %v895 = vpop.permute.xlu0 %894
    %896 = vrot.lane.b32.xlu0 %v887, 32
    %v897 = vpop.permute.xlu0 %896
    %898 = vrot.lane.b32.xlu0 %v888, 32
    %v899 = vpop.permute.xlu0 %898
    %900 = vrot.lane.b32.xlu0 %v889, 32
    %v901 = vpop.permute.xlu0 %900
    %v906 = vadd.f32 %v866, %v895
    %v907 = vadd.f32 %v867, %v897
    %v908 = vadd.f32 %v868, %v899
    %v909 = vadd.f32 %v869, %v901
    %v910 = vtanh.pop %v906
    %v911 = vtanh.pop %v907
    %v912 = vtanh.pop %v908
    %v913 = vtanh.pop %v909
    %918 = vrot.lane.b32.xlu0 %v910, 64
    %v919 = vpop.permute.xlu0 %918
    %920 = vrot.lane.b32.xlu0 %v911, 64
    %v921 = vpop.permute.xlu0 %920
    %922 = vrot.lane.b32.xlu0 %v912, 64
    %v923 = vpop.permute.xlu0 %922
    %924 = vrot.lane.b32.xlu0 %v913, 64
    %v925 = vpop.permute.xlu0 %924
    %v930 = vmul.f32 %v843, %v919
    %v931 = vmul.f32 %v845, %v921
    %v932 = vmul.f32 %v847, %v923
    %v933 = vmul.f32 %v849, %v925
    %v938 = vrot.slane %v930, 2
    %v939 = vrot.slane %v931, 1
    %v940 = vsel %vm528, %v939, %v938
    %v941 = vsel %vm531, %v932, %v940
    %v942 = vrot.slane %v933, 7
    %v943 = vsel %vm534, %v942, %v941
    %944 = vrot.lane.b32.xlu0 %v943, 32
    %v945 = vpop.permute.xlu0 %944
    %v946 = vsel %vm341, %v945, 0
    %948 = vmatprep.subr.mxu0 0.0
    %949 = vmatpush1.msra.mxu0 0.0
    %950 = vmatprep.subr.mxu0 0.0
    %951 = vmatpush1.msra.mxu0 0.0
    %952 = vmatprep.subr.mxu0 0.0
    %953 = vmatpush1.msra.mxu0 0.0
    %954 = vmatprep.subr.mxu0 0.0
    %955 = vmatpush1.msra.mxu0 0.0
    %956 = vmatprep.subr.mxu0 0.0
    %957 = vmatpush1.msra.mxu0 0.0
    %958 = vmatprep.subr.mxu0 0.0
    %959 = vmatpush1.msra.mxu0 0.0
    %960 = vmatprep.subr.mxu0 0.0
    %961 = vmatpush1.msra.mxu0 0.0
    %962 = vmatprep.subr.mxu0 0.0
    %963 = vmatpush1.msra.mxu0 0.0
    %964 = vmatprep.subr.mxu0 0.0
    %965 = vmatpush1.msra.mxu0 0.0
    %966 = vmatprep.subr.mxu0 0.0
    %967 = vmatpush1.msra.mxu0 0.0
    %968 = vmatprep.subr.mxu0 0.0
    %969 = vmatpush1.msra.mxu0 0.0
    %970 = vmatprep.subr.mxu0 0.0
    %971 = vmatpush1.msra.mxu0 0.0
    %972 = vmatprep.subr.mxu0 0.0
    %973 = vmatpush1.msra.mxu0 %v340
    %974 = vmatprep.subr.mxu0 0.0
    %975 = vmatpush1.msra.mxu0 %v339
    %976 = vmatprep.subr.mxu0 0.0
    %977 = vmatpush1.msra.mxu0 %v338
    %978 = vmatprep.subr.mxu0 0.0
    %979 = vmatpush1.msra.mxu0 %v337
    %980 = vmatprep.subr.mxu0 0.0
    %981 = vmatpush2.msra.mxu0 0.0
    %982 = vmatprep.subr.mxu0 0.0
    %983 = vmatpush2.msra.mxu0 0.0
    %984 = vmatprep.subr.mxu0 0.0
    %985 = vmatpush2.msra.mxu0 0.0
    %986 = vmatprep.subr.mxu0 0.0
    %987 = vmatpush2.msra.mxu0 0.0
    %988 = vmatprep.subr.mxu0 0.0
    %989 = vmatpush2.msra.mxu0 0.0
    %990 = vmatprep.subr.mxu0 0.0
    %991 = vmatpush2.msra.mxu0 0.0
    %992 = vmatprep.subr.mxu0 0.0
    %993 = vmatpush2.msra.mxu0 0.0
    %994 = vmatprep.subr.mxu0 0.0
    %995 = vmatpush2.msra.mxu0 0.0
    %996 = vmatprep.subr.mxu0 0.0
    %997 = vmatpush2.msra.mxu0 0.0
    %998 = vmatprep.subr.mxu0 0.0
    %999 = vmatpush2.msra.mxu0 0.0
    %1000 = vmatprep.subr.mxu0 0.0
    %1001 = vmatpush2.msra.mxu0 0.0
    %1002 = vmatprep.subr.mxu0 0.0
    %1003 = vmatpush2.msra.mxu0 0.0
    %1004 = vmatprep.subr.mxu0 0.0
    %1005 = vmatpush2.msra.mxu0 0.0
    %1006 = vmatprep.subr.mxu0 0.0
    %1007 = vmatpush2.msra.mxu0 0.0
    %1008 = vmatprep.subr.mxu0 0.0
    %1009 = vmatpush2.msra.mxu0 0.0
    %1010 = vmatprep.subr.mxu0 0.0
    %1011 = vmatpush2.msra.mxu0 0.0
    %1012 = vmatprep.mubr.f32.mxu0 0.0
    %1013 = vmatmul.mubr.f32.gmra.mxu0 %v946
    %v1014 = vpop.f32.mrf.mxu0
    %v1015 = vadd.f32 0.0, %v1014
    %v1016 = vpop.f32.mrf.mxu0
    %1017 = vdwg.mxu0
    %v1019 = vrot.slane %v1015, 5
    %v1020 = vrot.slane %v1015, 6
    %v1021 = vrot.slane %v1015, 7
    %v1026 = vadd.f32 %v319, %v1019
    %v1027 = vadd.f32 %v324, %v1020
    %v1028 = vadd.f32 %v329, %v1021
    %v1029 = vadd.f32 %v334, %v1015
    %v1030 = vxor.u32 %v1026, 2147483648
    %v1031 = vxor.u32 %v1027, 2147483648
    %v1032 = vxor.u32 %v1028, 2147483648
    %v1033 = vxor.u32 %v1029, 2147483648
    %v1034 = vmul.f32 %v1030, 1.442695
    %v1035 = vpow.pop %v1034
    %v1036 = vmul.f32 %v1031, 1.442695
    %v1037 = vpow.pop %v1036
    %v1038 = vmul.f32 %v1032, 1.442695
    %v1039 = vpow.pop %v1038
    %v1040 = vmul.f32 %v1033, 1.442695
    %v1041 = vpow.pop %v1040
    %v1042 = vadd.f32 %v1035, 1.0
    %v1043 = vadd.f32 %v1037, 1.0
    %v1044 = vadd.f32 %v1039, 1.0
    %v1045 = vadd.f32 %v1041, 1.0
    %v1046 = vrcp.pop %v1042
    %v1047 = vmul.f32 1.0, %v1046
    %v1048 = vrcp.pop %v1043
    %v1049 = vmul.f32 1.0, %v1048
    %v1050 = vrcp.pop %v1044
    %v1051 = vmul.f32 1.0, %v1050
    %v1052 = vrcp.pop %v1045
    %v1053 = vmul.f32 1.0, %v1052
    %v1054 = vtanh.pop %v1026
    %v1055 = vtanh.pop %v1027
    %v1056 = vtanh.pop %v1028
    %v1057 = vtanh.pop %v1029
    %v1062 = vrot.slane %v906, 7
    %v1063 = vrot.slane %v907, 7
    %v1064 = vrot.slane %v908, 7
    %v1065 = vrot.slane %v909, 7
    %v1070 = vmul.f32 %v1047, %v1062
    %v1071 = vmul.f32 %v1049, %v1063
    %v1072 = vmul.f32 %v1051, %v1064
    %v1073 = vmul.f32 %v1053, %v1065
    %1078 = vrot.lane.b32.xlu0 %v1054, 64
    %v1079 = vpop.permute.xlu0 %1078
    %1080 = vrot.lane.b32.xlu0 %v1055, 64
    %v1081 = vpop.permute.xlu0 %1080
    %1082 = vrot.lane.b32.xlu0 %v1056, 64
    %v1083 = vpop.permute.xlu0 %1082
    %1084 = vrot.lane.b32.xlu0 %v1057, 64
    %v1085 = vpop.permute.xlu0 %1084
    %v1090 = vmul.f32 %v1047, %v1079
    %v1091 = vmul.f32 %v1049, %v1081
    %v1092 = vmul.f32 %v1051, %v1083
    %v1093 = vmul.f32 %v1053, %v1085
    %1098 = vrot.lane.b32.xlu0 %v1090, 32
    %v1099 = vpop.permute.xlu0 %1098
    %1100 = vrot.lane.b32.xlu0 %v1091, 32
    %v1101 = vpop.permute.xlu0 %1100
    %1102 = vrot.lane.b32.xlu0 %v1092, 32
    %v1103 = vpop.permute.xlu0 %1102
    %1104 = vrot.lane.b32.xlu0 %v1093, 32
    %v1105 = vpop.permute.xlu0 %1104
    %v1110 = vadd.f32 %v1070, %v1099
    %v1111 = vadd.f32 %v1071, %v1101
    %v1112 = vadd.f32 %v1072, %v1103
    %v1113 = vadd.f32 %v1073, %v1105
    %v1114 = vtanh.pop %v1110
    %v1115 = vtanh.pop %v1111
    %v1116 = vtanh.pop %v1112
    %v1117 = vtanh.pop %v1113
    %1122 = vrot.lane.b32.xlu0 %v1114, 64
    %v1123 = vpop.permute.xlu0 %1122
    %1124 = vrot.lane.b32.xlu0 %v1115, 64
    %v1125 = vpop.permute.xlu0 %1124
    %1126 = vrot.lane.b32.xlu0 %v1116, 64
    %v1127 = vpop.permute.xlu0 %1126
    %1128 = vrot.lane.b32.xlu0 %v1117, 64
    %v1129 = vpop.permute.xlu0 %1128
    %v1134 = vmul.f32 %v1047, %v1123
    %v1135 = vmul.f32 %v1049, %v1125
    %v1136 = vmul.f32 %v1051, %v1127
    %v1137 = vmul.f32 %v1053, %v1129
    %v1142 = vrot.slane %v1134, 3
    %v1143 = vrot.slane %v1135, 2
    %v1144 = vsel %vm528, %v1143, %v1142
    %v1145 = vrot.slane %v1136, 1
    %v1146 = vsel %vm531, %v1145, %v1144
    %v1147 = vsel %vm534, %v1137, %v1146
    %1148 = vrot.lane.b32.xlu0 %v1147, 32
    %v1149 = vpop.permute.xlu0 %1148
    %v1150 = vsel %vm341, %v1149, 0
    %1152 = vmatprep.subr.mxu0 0.0
    %1153 = vmatpush1.msra.mxu0 0.0
    %1154 = vmatprep.subr.mxu0 0.0
    %1155 = vmatpush1.msra.mxu0 0.0
    %1156 = vmatprep.subr.mxu0 0.0
    %1157 = vmatpush1.msra.mxu0 0.0
    %1158 = vmatprep.subr.mxu0 0.0
    %1159 = vmatpush1.msra.mxu0 0.0
    %1160 = vmatprep.subr.mxu0 0.0
    %1161 = vmatpush1.msra.mxu0 0.0
    %1162 = vmatprep.subr.mxu0 0.0
    %1163 = vmatpush1.msra.mxu0 0.0
    %1164 = vmatprep.subr.mxu0 0.0
    %1165 = vmatpush1.msra.mxu0 0.0
    %1166 = vmatprep.subr.mxu0 0.0
    %1167 = vmatpush1.msra.mxu0 0.0
    %1168 = vmatprep.subr.mxu0 0.0
    %1169 = vmatpush1.msra.mxu0 0.0
    %1170 = vmatprep.subr.mxu0 0.0
    %1171 = vmatpush1.msra.mxu0 0.0
    %1172 = vmatprep.subr.mxu0 0.0
    %1173 = vmatpush1.msra.mxu0 0.0
    %1174 = vmatprep.subr.mxu0 0.0
    %1175 = vmatpush1.msra.mxu0 0.0
    %1176 = vmatprep.subr.mxu0 0.0
    %1177 = vmatpush1.msra.mxu0 %v340
    %1178 = vmatprep.subr.mxu0 0.0
    %1179 = vmatpush1.msra.mxu0 %v339
    %1180 = vmatprep.subr.mxu0 0.0
    %1181 = vmatpush1.msra.mxu0 %v338
    %1182 = vmatprep.subr.mxu0 0.0
    %1183 = vmatpush1.msra.mxu0 %v337
    %1184 = vmatprep.subr.mxu0 0.0
    %1185 = vmatpush2.msra.mxu0 0.0
    %1186 = vmatprep.subr.mxu0 0.0
    %1187 = vmatpush2.msra.mxu0 0.0
    %1188 = vmatprep.subr.mxu0 0.0
    %1189 = vmatpush2.msra.mxu0 0.0
    %1190 = vmatprep.subr.mxu0 0.0
    %1191 = vmatpush2.msra.mxu0 0.0
    %1192 = vmatprep.subr.mxu0 0.0
    %1193 = vmatpush2.msra.mxu0 0.0
    %1194 = vmatprep.subr.mxu0 0.0
    %1195 = vmatpush2.msra.mxu0 0.0
    %1196 = vmatprep.subr.mxu0 0.0
    %1197 = vmatpush2.msra.mxu0 0.0
    %1198 = vmatprep.subr.mxu0 0.0
    %1199 = vmatpush2.msra.mxu0 0.0
    %1200 = vmatprep.subr.mxu0 0.0
    %1201 = vmatpush2.msra.mxu0 0.0
    %1202 = vmatprep.subr.mxu0 0.0
    %1203 = vmatpush2.msra.mxu0 0.0
    %1204 = vmatprep.subr.mxu0 0.0
    %1205 = vmatpush2.msra.mxu0 0.0
    %1206 = vmatprep.subr.mxu0 0.0
    %1207 = vmatpush2.msra.mxu0 0.0
    %1208 = vmatprep.subr.mxu0 0.0
    %1209 = vmatpush2.msra.mxu0 0.0
    %1210 = vmatprep.subr.mxu0 0.0
    %1211 = vmatpush2.msra.mxu0 0.0
    %1212 = vmatprep.subr.mxu0 0.0
    %1213 = vmatpush2.msra.mxu0 0.0
    %1214 = vmatprep.subr.mxu0 0.0
    %1215 = vmatpush2.msra.mxu0 0.0
    %1216 = vmatprep.mubr.f32.mxu0 0.0
    %1217 = vmatmul.mubr.f32.gmra.mxu0 %v1150
    %v1218 = vpop.f32.mrf.mxu0
    %v1219 = vadd.f32 0.0, %v1218
    %v1220 = vpop.f32.mrf.mxu0
    %1221 = vdwg.mxu0
    %v1223 = vrot.slane %v1219, 4
    %v1224 = vrot.slane %v1219, 5
    %v1225 = vrot.slane %v1219, 6
    %v1226 = vrot.slane %v1219, 7
    %v1231 = vadd.f32 %v319, %v1223
    %v1232 = vadd.f32 %v324, %v1224
    %v1233 = vadd.f32 %v329, %v1225
    %v1234 = vadd.f32 %v334, %v1226
    %v1235 = vxor.u32 %v1231, 2147483648
    %v1236 = vxor.u32 %v1232, 2147483648
    %v1237 = vxor.u32 %v1233, 2147483648
    %v1238 = vxor.u32 %v1234, 2147483648
    %v1239 = vmul.f32 %v1235, 1.442695
    %v1240 = vpow.pop %v1239
    %v1241 = vmul.f32 %v1236, 1.442695
    %v1242 = vpow.pop %v1241
    %v1243 = vmul.f32 %v1237, 1.442695
    %v1244 = vpow.pop %v1243
    %v1245 = vmul.f32 %v1238, 1.442695
    %v1246 = vpow.pop %v1245
    %v1247 = vadd.f32 %v1240, 1.0
    %v1248 = vadd.f32 %v1242, 1.0
    %v1249 = vadd.f32 %v1244, 1.0
    %v1250 = vadd.f32 %v1246, 1.0
    %v1251 = vrcp.pop %v1247
    %v1252 = vmul.f32 1.0, %v1251
    %v1253 = vrcp.pop %v1248
    %v1254 = vmul.f32 1.0, %v1253
    %v1255 = vrcp.pop %v1249
    %v1256 = vmul.f32 1.0, %v1255
    %v1257 = vrcp.pop %v1250
    %v1258 = vmul.f32 1.0, %v1257
    %v1259 = vtanh.pop %v1231
    %v1260 = vtanh.pop %v1232
    %v1261 = vtanh.pop %v1233
    %v1262 = vtanh.pop %v1234
    %v1267 = vrot.slane %v1110, 7
    %v1268 = vrot.slane %v1111, 7
    %v1269 = vrot.slane %v1112, 7
    %v1270 = vrot.slane %v1113, 7
    %v1275 = vmul.f32 %v1252, %v1267
    %v1276 = vmul.f32 %v1254, %v1268
    %v1277 = vmul.f32 %v1256, %v1269
    %v1278 = vmul.f32 %v1258, %v1270
    %1283 = vrot.lane.b32.xlu0 %v1259, 64
    %v1284 = vpop.permute.xlu0 %1283
    %1285 = vrot.lane.b32.xlu0 %v1260, 64
    %v1286 = vpop.permute.xlu0 %1285
    %1287 = vrot.lane.b32.xlu0 %v1261, 64
    %v1288 = vpop.permute.xlu0 %1287
    %1289 = vrot.lane.b32.xlu0 %v1262, 64
    %v1290 = vpop.permute.xlu0 %1289
    %v1295 = vmul.f32 %v1252, %v1284
    %v1296 = vmul.f32 %v1254, %v1286
    %v1297 = vmul.f32 %v1256, %v1288
    %v1298 = vmul.f32 %v1258, %v1290
    %1303 = vrot.lane.b32.xlu0 %v1295, 32
    %v1304 = vpop.permute.xlu0 %1303
    %1305 = vrot.lane.b32.xlu0 %v1296, 32
    %v1306 = vpop.permute.xlu0 %1305
    %1307 = vrot.lane.b32.xlu0 %v1297, 32
    %v1308 = vpop.permute.xlu0 %1307
    %1309 = vrot.lane.b32.xlu0 %v1298, 32
    %v1310 = vpop.permute.xlu0 %1309
    %v1315 = vadd.f32 %v1275, %v1304
    %v1316 = vadd.f32 %v1276, %v1306
    %v1317 = vadd.f32 %v1277, %v1308
    %v1318 = vadd.f32 %v1278, %v1310
    %v1319 = vtanh.pop %v1315
    %v1320 = vtanh.pop %v1316
    %v1321 = vtanh.pop %v1317
    %v1322 = vtanh.pop %v1318
    %1327 = vrot.lane.b32.xlu0 %v1319, 64
    %v1328 = vpop.permute.xlu0 %1327
    %1329 = vrot.lane.b32.xlu0 %v1320, 64
    %v1330 = vpop.permute.xlu0 %1329
    %1331 = vrot.lane.b32.xlu0 %v1321, 64
    %v1332 = vpop.permute.xlu0 %1331
    %1333 = vrot.lane.b32.xlu0 %v1322, 64
    %v1334 = vpop.permute.xlu0 %1333
    %v1339 = vmul.f32 %v1252, %v1328
    %v1340 = vmul.f32 %v1254, %v1330
    %v1341 = vmul.f32 %v1256, %v1332
    %v1342 = vmul.f32 %v1258, %v1334
    %v1347 = vrot.slane %v1339, 4
    %v1348 = vrot.slane %v1340, 3
    %v1349 = vsel %vm528, %v1348, %v1347
    %v1350 = vrot.slane %v1341, 2
    %v1351 = vsel %vm531, %v1350, %v1349
    %v1352 = vrot.slane %v1342, 1
    %v1353 = vsel %vm534, %v1352, %v1351
    %1354 = vrot.lane.b32.xlu0 %v1353, 32
    %v1355 = vpop.permute.xlu0 %1354
    %v1356 = vsel %vm341, %v1355, 0
    %1358 = vmatprep.subr.mxu0 0.0
    %1359 = vmatpush1.msra.mxu0 0.0
    %1360 = vmatprep.subr.mxu0 0.0
    %1361 = vmatpush1.msra.mxu0 0.0
    %1362 = vmatprep.subr.mxu0 0.0
    %1363 = vmatpush1.msra.mxu0 0.0
    %1364 = vmatprep.subr.mxu0 0.0
    %1365 = vmatpush1.msra.mxu0 0.0
    %1366 = vmatprep.subr.mxu0 0.0
    %1367 = vmatpush1.msra.mxu0 0.0
    %1368 = vmatprep.subr.mxu0 0.0
    %1369 = vmatpush1.msra.mxu0 0.0
    %1370 = vmatprep.subr.mxu0 0.0
    %1371 = vmatpush1.msra.mxu0 0.0
    %1372 = vmatprep.subr.mxu0 0.0
    %1373 = vmatpush1.msra.mxu0 0.0
    %1374 = vmatprep.subr.mxu0 0.0
    %1375 = vmatpush1.msra.mxu0 0.0
    %1376 = vmatprep.subr.mxu0 0.0
    %1377 = vmatpush1.msra.mxu0 0.0
    %1378 = vmatprep.subr.mxu0 0.0
    %1379 = vmatpush1.msra.mxu0 0.0
    %1380 = vmatprep.subr.mxu0 0.0
    %1381 = vmatpush1.msra.mxu0 0.0
    %1382 = vmatprep.subr.mxu0 0.0
    %1383 = vmatpush1.msra.mxu0 %v340
    %1384 = vmatprep.subr.mxu0 0.0
    %1385 = vmatpush1.msra.mxu0 %v339
    %1386 = vmatprep.subr.mxu0 0.0
    %1387 = vmatpush1.msra.mxu0 %v338
    %1388 = vmatprep.subr.mxu0 0.0
    %1389 = vmatpush1.msra.mxu0 %v337
    %1390 = vmatprep.subr.mxu0 0.0
    %1391 = vmatpush2.msra.mxu0 0.0
    %1392 = vmatprep.subr.mxu0 0.0
    %1393 = vmatpush2.msra.mxu0 0.0
    %1394 = vmatprep.subr.mxu0 0.0
    %1395 = vmatpush2.msra.mxu0 0.0
    %1396 = vmatprep.subr.mxu0 0.0
    %1397 = vmatpush2.msra.mxu0 0.0
    %1398 = vmatprep.subr.mxu0 0.0
    %1399 = vmatpush2.msra.mxu0 0.0
    %1400 = vmatprep.subr.mxu0 0.0
    %1401 = vmatpush2.msra.mxu0 0.0
    %1402 = vmatprep.subr.mxu0 0.0
    %1403 = vmatpush2.msra.mxu0 0.0
    %1404 = vmatprep.subr.mxu0 0.0
    %1405 = vmatpush2.msra.mxu0 0.0
    %1406 = vmatprep.subr.mxu0 0.0
    %1407 = vmatpush2.msra.mxu0 0.0
    %1408 = vmatprep.subr.mxu0 0.0
    %1409 = vmatpush2.msra.mxu0 0.0
    %1410 = vmatprep.subr.mxu0 0.0
    %1411 = vmatpush2.msra.mxu0 0.0
    %1412 = vmatprep.subr.mxu0 0.0
    %1413 = vmatpush2.msra.mxu0 0.0
    %1414 = vmatprep.subr.mxu0 0.0
    %1415 = vmatpush2.msra.mxu0 0.0
    %1416 = vmatprep.subr.mxu0 0.0
    %1417 = vmatpush2.msra.mxu0 0.0
    %1418 = vmatprep.subr.mxu0 0.0
    %1419 = vmatpush2.msra.mxu0 0.0
    %1420 = vmatprep.subr.mxu0 0.0
    %1421 = vmatpush2.msra.mxu0 0.0
    %1422 = vmatprep.mubr.f32.mxu0 0.0
    %1423 = vmatmul.mubr.f32.gmra.mxu0 %v1356
    %v1424 = vpop.f32.mrf.mxu0
    %v1425 = vadd.f32 0.0, %v1424
    %v1426 = vpop.f32.mrf.mxu0
    %1427 = vdwg.mxu0
    %v1429 = vrot.slane %v1425, 3
    %v1430 = vrot.slane %v1425, 4
    %v1431 = vrot.slane %v1425, 5
    %v1432 = vrot.slane %v1425, 6
    %v1437 = vadd.f32 %v319, %v1429
    %v1438 = vadd.f32 %v324, %v1430
    %v1439 = vadd.f32 %v329, %v1431
    %v1440 = vadd.f32 %v334, %v1432
    %v1441 = vxor.u32 %v1437, 2147483648
    %v1442 = vxor.u32 %v1438, 2147483648
    %v1443 = vxor.u32 %v1439, 2147483648
    %v1444 = vxor.u32 %v1440, 2147483648
    %v1445 = vmul.f32 %v1441, 1.442695
    %v1446 = vpow.pop %v1445
    %v1447 = vmul.f32 %v1442, 1.442695
    %v1448 = vpow.pop %v1447
    %v1449 = vmul.f32 %v1443, 1.442695
    %v1450 = vpow.pop %v1449
    %v1451 = vmul.f32 %v1444, 1.442695
    %v1452 = vpow.pop %v1451
    %v1453 = vadd.f32 %v1446, 1.0
    %v1454 = vadd.f32 %v1448, 1.0
    %v1455 = vadd.f32 %v1450, 1.0
    %v1456 = vadd.f32 %v1452, 1.0
    %v1457 = vrcp.pop %v1453
    %v1458 = vmul.f32 1.0, %v1457
    %v1459 = vrcp.pop %v1454
    %v1460 = vmul.f32 1.0, %v1459
    %v1461 = vrcp.pop %v1455
    %v1462 = vmul.f32 1.0, %v1461
    %v1463 = vrcp.pop %v1456
    %v1464 = vmul.f32 1.0, %v1463
    %v1465 = vtanh.pop %v1437
    %v1466 = vtanh.pop %v1438
    %v1467 = vtanh.pop %v1439
    %v1468 = vtanh.pop %v1440
    %v1473 = vrot.slane %v1315, 7
    %v1474 = vrot.slane %v1316, 7
    %v1475 = vrot.slane %v1317, 7
    %v1476 = vrot.slane %v1318, 7
    %v1481 = vmul.f32 %v1458, %v1473
    %v1482 = vmul.f32 %v1460, %v1474
    %v1483 = vmul.f32 %v1462, %v1475
    %v1484 = vmul.f32 %v1464, %v1476
    %1489 = vrot.lane.b32.xlu0 %v1465, 64
    %v1490 = vpop.permute.xlu0 %1489
    %1491 = vrot.lane.b32.xlu0 %v1466, 64
    %v1492 = vpop.permute.xlu0 %1491
    %1493 = vrot.lane.b32.xlu0 %v1467, 64
    %v1494 = vpop.permute.xlu0 %1493
    %1495 = vrot.lane.b32.xlu0 %v1468, 64
    %v1496 = vpop.permute.xlu0 %1495
    %v1501 = vmul.f32 %v1458, %v1490
    %v1502 = vmul.f32 %v1460, %v1492
    %v1503 = vmul.f32 %v1462, %v1494
    %v1504 = vmul.f32 %v1464, %v1496
    %1509 = vrot.lane.b32.xlu0 %v1501, 32
    %v1510 = vpop.permute.xlu0 %1509
    %1511 = vrot.lane.b32.xlu0 %v1502, 32
    %v1512 = vpop.permute.xlu0 %1511
    %1513 = vrot.lane.b32.xlu0 %v1503, 32
    %v1514 = vpop.permute.xlu0 %1513
    %1515 = vrot.lane.b32.xlu0 %v1504, 32
    %v1516 = vpop.permute.xlu0 %1515
    %v1521 = vadd.f32 %v1481, %v1510
    %v1522 = vadd.f32 %v1482, %v1512
    %v1523 = vadd.f32 %v1483, %v1514
    %v1524 = vadd.f32 %v1484, %v1516
    %v1525 = vtanh.pop %v1521
    %v1526 = vtanh.pop %v1522
    %v1527 = vtanh.pop %v1523
    %v1528 = vtanh.pop %v1524
    %1533 = vrot.lane.b32.xlu0 %v1525, 64
    %v1534 = vpop.permute.xlu0 %1533
    %1535 = vrot.lane.b32.xlu0 %v1526, 64
    %v1536 = vpop.permute.xlu0 %1535
    %1537 = vrot.lane.b32.xlu0 %v1527, 64
    %v1538 = vpop.permute.xlu0 %1537
    %1539 = vrot.lane.b32.xlu0 %v1528, 64
    %v1540 = vpop.permute.xlu0 %1539
    %v1545 = vmul.f32 %v1458, %v1534
    %v1546 = vmul.f32 %v1460, %v1536
    %v1547 = vmul.f32 %v1462, %v1538
    %v1548 = vmul.f32 %v1464, %v1540
    %v1553 = vrot.slane %v1545, 5
    %v1554 = vrot.slane %v1546, 4
    %v1555 = vsel %vm528, %v1554, %v1553
    %v1556 = vrot.slane %v1547, 3
    %v1557 = vsel %vm531, %v1556, %v1555
    %v1558 = vrot.slane %v1548, 2
    %v1559 = vsel %vm534, %v1558, %v1557
    %1560 = vrot.lane.b32.xlu0 %v1559, 32
    %v1561 = vpop.permute.xlu0 %1560
    %v1562 = vsel %vm341, %v1561, 0
    %1564 = vmatprep.subr.mxu0 0.0
    %1565 = vmatpush1.msra.mxu0 0.0
    %1566 = vmatprep.subr.mxu0 0.0
    %1567 = vmatpush1.msra.mxu0 0.0
    %1568 = vmatprep.subr.mxu0 0.0
    %1569 = vmatpush1.msra.mxu0 0.0
    %1570 = vmatprep.subr.mxu0 0.0
    %1571 = vmatpush1.msra.mxu0 0.0
    %1572 = vmatprep.subr.mxu0 0.0
    %1573 = vmatpush1.msra.mxu0 0.0
    %1574 = vmatprep.subr.mxu0 0.0
    %1575 = vmatpush1.msra.mxu0 0.0
    %1576 = vmatprep.subr.mxu0 0.0
    %1577 = vmatpush1.msra.mxu0 0.0
    %1578 = vmatprep.subr.mxu0 0.0
    %1579 = vmatpush1.msra.mxu0 0.0
    %1580 = vmatprep.subr.mxu0 0.0
    %1581 = vmatpush1.msra.mxu0 0.0
    %1582 = vmatprep.subr.mxu0 0.0
    %1583 = vmatpush1.msra.mxu0 0.0
    %1584 = vmatprep.subr.mxu0 0.0
    %1585 = vmatpush1.msra.mxu0 0.0
    %1586 = vmatprep.subr.mxu0 0.0
    %1587 = vmatpush1.msra.mxu0 0.0
    %1588 = vmatprep.subr.mxu0 0.0
    %1589 = vmatpush1.msra.mxu0 %v340
    %1590 = vmatprep.subr.mxu0 0.0
    %1591 = vmatpush1.msra.mxu0 %v339
    %1592 = vmatprep.subr.mxu0 0.0
    %1593 = vmatpush1.msra.mxu0 %v338
    %1594 = vmatprep.subr.mxu0 0.0
    %1595 = vmatpush1.msra.mxu0 %v337
    %1596 = vmatprep.subr.mxu0 0.0
    %1597 = vmatpush2.msra.mxu0 0.0
    %1598 = vmatprep.subr.mxu0 0.0
    %1599 = vmatpush2.msra.mxu0 0.0
    %1600 = vmatprep.subr.mxu0 0.0
    %1601 = vmatpush2.msra.mxu0 0.0
    %1602 = vmatprep.subr.mxu0 0.0
    %1603 = vmatpush2.msra.mxu0 0.0
    %1604 = vmatprep.subr.mxu0 0.0
    %1605 = vmatpush2.msra.mxu0 0.0
    %1606 = vmatprep.subr.mxu0 0.0
    %1607 = vmatpush2.msra.mxu0 0.0
    %1608 = vmatprep.subr.mxu0 0.0
    %1609 = vmatpush2.msra.mxu0 0.0
    %1610 = vmatprep.subr.mxu0 0.0
    %1611 = vmatpush2.msra.mxu0 0.0
    %1612 = vmatprep.subr.mxu0 0.0
    %1613 = vmatpush2.msra.mxu0 0.0
    %1614 = vmatprep.subr.mxu0 0.0
    %1615 = vmatpush2.msra.mxu0 0.0
    %1616 = vmatprep.subr.mxu0 0.0
    %1617 = vmatpush2.msra.mxu0 0.0
    %1618 = vmatprep.subr.mxu0 0.0
    %1619 = vmatpush2.msra.mxu0 0.0
    %1620 = vmatprep.subr.mxu0 0.0
    %1621 = vmatpush2.msra.mxu0 0.0
    %1622 = vmatprep.subr.mxu0 0.0
    %1623 = vmatpush2.msra.mxu0 0.0
    %1624 = vmatprep.subr.mxu0 0.0
    %1625 = vmatpush2.msra.mxu0 0.0
    %1626 = vmatprep.subr.mxu0 0.0
    %1627 = vmatpush2.msra.mxu0 0.0
    %1628 = vmatprep.mubr.f32.mxu0 0.0
    %1629 = vmatmul.mubr.f32.gmra.mxu0 %v1562
    %v1630 = vpop.f32.mrf.mxu0
    %v1631 = vadd.f32 0.0, %v1630
    %v1632 = vpop.f32.mrf.mxu0
    %1633 = vdwg.mxu0
    %v1635 = vrot.slane %v1631, 2
    %v1636 = vrot.slane %v1631, 3
    %v1637 = vrot.slane %v1631, 4
    %v1638 = vrot.slane %v1631, 5
    %v1643 = vadd.f32 %v319, %v1635
    %v1644 = vadd.f32 %v324, %v1636
    %v1645 = vadd.f32 %v329, %v1637
    %v1646 = vadd.f32 %v334, %v1638
    %v1647 = vxor.u32 %v1643, 2147483648
    %v1648 = vxor.u32 %v1644, 2147483648
    %v1649 = vxor.u32 %v1645, 2147483648
    %v1650 = vxor.u32 %v1646, 2147483648
    %v1651 = vmul.f32 %v1647, 1.442695
    %v1652 = vpow.pop %v1651
    %v1653 = vmul.f32 %v1648, 1.442695
    %v1654 = vpow.pop %v1653
    %v1655 = vmul.f32 %v1649, 1.442695
    %v1656 = vpow.pop %v1655
    %v1657 = vmul.f32 %v1650, 1.442695
    %v1658 = vpow.pop %v1657
    %v1659 = vadd.f32 %v1652, 1.0
    %v1660 = vadd.f32 %v1654, 1.0
    %v1661 = vadd.f32 %v1656, 1.0
    %v1662 = vadd.f32 %v1658, 1.0
    %v1663 = vrcp.pop %v1659
    %v1664 = vmul.f32 1.0, %v1663
    %v1665 = vrcp.pop %v1660
    %v1666 = vmul.f32 1.0, %v1665
    %v1667 = vrcp.pop %v1661
    %v1668 = vmul.f32 1.0, %v1667
    %v1669 = vrcp.pop %v1662
    %v1670 = vmul.f32 1.0, %v1669
    %v1671 = vtanh.pop %v1643
    %v1672 = vtanh.pop %v1644
    %v1673 = vtanh.pop %v1645
    %v1674 = vtanh.pop %v1646
    %v1679 = vrot.slane %v1521, 7
    %v1680 = vrot.slane %v1522, 7
    %v1681 = vrot.slane %v1523, 7
    %v1682 = vrot.slane %v1524, 7
    %v1687 = vmul.f32 %v1664, %v1679
    %v1688 = vmul.f32 %v1666, %v1680
    %v1689 = vmul.f32 %v1668, %v1681
    %v1690 = vmul.f32 %v1670, %v1682
    %1695 = vrot.lane.b32.xlu0 %v1671, 64
    %v1696 = vpop.permute.xlu0 %1695
    %1697 = vrot.lane.b32.xlu0 %v1672, 64
    %v1698 = vpop.permute.xlu0 %1697
    %1699 = vrot.lane.b32.xlu0 %v1673, 64
    %v1700 = vpop.permute.xlu0 %1699
    %1701 = vrot.lane.b32.xlu0 %v1674, 64
    %v1702 = vpop.permute.xlu0 %1701
    %v1707 = vmul.f32 %v1664, %v1696
    %v1708 = vmul.f32 %v1666, %v1698
    %v1709 = vmul.f32 %v1668, %v1700
    %v1710 = vmul.f32 %v1670, %v1702
    %1715 = vrot.lane.b32.xlu0 %v1707, 32
    %v1716 = vpop.permute.xlu0 %1715
    %1717 = vrot.lane.b32.xlu0 %v1708, 32
    %v1718 = vpop.permute.xlu0 %1717
    %1719 = vrot.lane.b32.xlu0 %v1709, 32
    %v1720 = vpop.permute.xlu0 %1719
    %1721 = vrot.lane.b32.xlu0 %v1710, 32
    %v1722 = vpop.permute.xlu0 %1721
    %v1727 = vadd.f32 %v1687, %v1716
    %v1728 = vadd.f32 %v1688, %v1718
    %v1729 = vadd.f32 %v1689, %v1720
    %v1730 = vadd.f32 %v1690, %v1722
    %v1731 = vtanh.pop %v1727
    %v1732 = vtanh.pop %v1728
    %v1733 = vtanh.pop %v1729
    %v1734 = vtanh.pop %v1730
    %1739 = vrot.lane.b32.xlu0 %v1731, 64
    %v1740 = vpop.permute.xlu0 %1739
    %1741 = vrot.lane.b32.xlu0 %v1732, 64
    %v1742 = vpop.permute.xlu0 %1741
    %1743 = vrot.lane.b32.xlu0 %v1733, 64
    %v1744 = vpop.permute.xlu0 %1743
    %1745 = vrot.lane.b32.xlu0 %v1734, 64
    %v1746 = vpop.permute.xlu0 %1745
    %v1751 = vmul.f32 %v1664, %v1740
    %v1752 = vmul.f32 %v1666, %v1742
    %v1753 = vmul.f32 %v1668, %v1744
    %v1754 = vmul.f32 %v1670, %v1746
    %v1759 = vrot.slane %v1751, 6
    %v1760 = vrot.slane %v1752, 5
    %v1761 = vsel %vm528, %v1760, %v1759
    %v1762 = vrot.slane %v1753, 4
    %v1763 = vsel %vm531, %v1762, %v1761
    %v1764 = vrot.slane %v1754, 3
    %v1765 = vsel %vm534, %v1764, %v1763
    %1766 = vrot.lane.b32.xlu0 %v1765, 32
    %v1767 = vpop.permute.xlu0 %1766
    %v1768 = vsel %vm341, %v1767, 0
    %1770 = vmatprep.subr.mxu0 0.0
    %1771 = vmatpush1.msra.mxu0 0.0
    %1772 = vmatprep.subr.mxu0 0.0
    %1773 = vmatpush1.msra.mxu0 0.0
    %1774 = vmatprep.subr.mxu0 0.0
    %1775 = vmatpush1.msra.mxu0 0.0
    %1776 = vmatprep.subr.mxu0 0.0
    %1777 = vmatpush1.msra.mxu0 0.0
    %1778 = vmatprep.subr.mxu0 0.0
    %1779 = vmatpush1.msra.mxu0 0.0
    %1780 = vmatprep.subr.mxu0 0.0
    %1781 = vmatpush1.msra.mxu0 0.0
    %1782 = vmatprep.subr.mxu0 0.0
    %1783 = vmatpush1.msra.mxu0 0.0
    %1784 = vmatprep.subr.mxu0 0.0
    %1785 = vmatpush1.msra.mxu0 0.0
    %1786 = vmatprep.subr.mxu0 0.0
    %1787 = vmatpush1.msra.mxu0 0.0
    %1788 = vmatprep.subr.mxu0 0.0
    %1789 = vmatpush1.msra.mxu0 0.0
    %1790 = vmatprep.subr.mxu0 0.0
    %1791 = vmatpush1.msra.mxu0 0.0
    %1792 = vmatprep.subr.mxu0 0.0
    %1793 = vmatpush1.msra.mxu0 0.0
    %1794 = vmatprep.subr.mxu0 0.0
    %1795 = vmatpush1.msra.mxu0 %v340
    %1796 = vmatprep.subr.mxu0 0.0
    %1797 = vmatpush1.msra.mxu0 %v339
    %1798 = vmatprep.subr.mxu0 0.0
    %1799 = vmatpush1.msra.mxu0 %v338
    %1800 = vmatprep.subr.mxu0 0.0
    %1801 = vmatpush1.msra.mxu0 %v337
    %1802 = vmatprep.subr.mxu0 0.0
    %1803 = vmatpush2.msra.mxu0 0.0
    %1804 = vmatprep.subr.mxu0 0.0
    %1805 = vmatpush2.msra.mxu0 0.0
    %1806 = vmatprep.subr.mxu0 0.0
    %1807 = vmatpush2.msra.mxu0 0.0
    %1808 = vmatprep.subr.mxu0 0.0
    %1809 = vmatpush2.msra.mxu0 0.0
    %1810 = vmatprep.subr.mxu0 0.0
    %1811 = vmatpush2.msra.mxu0 0.0
    %1812 = vmatprep.subr.mxu0 0.0
    %1813 = vmatpush2.msra.mxu0 0.0
    %1814 = vmatprep.subr.mxu0 0.0
    %1815 = vmatpush2.msra.mxu0 0.0
    %1816 = vmatprep.subr.mxu0 0.0
    %1817 = vmatpush2.msra.mxu0 0.0
    %1818 = vmatprep.subr.mxu0 0.0
    %1819 = vmatpush2.msra.mxu0 0.0
    %1820 = vmatprep.subr.mxu0 0.0
    %1821 = vmatpush2.msra.mxu0 0.0
    %1822 = vmatprep.subr.mxu0 0.0
    %1823 = vmatpush2.msra.mxu0 0.0
    %1824 = vmatprep.subr.mxu0 0.0
    %1825 = vmatpush2.msra.mxu0 0.0
    %1826 = vmatprep.subr.mxu0 0.0
    %1827 = vmatpush2.msra.mxu0 0.0
    %1828 = vmatprep.subr.mxu0 0.0
    %1829 = vmatpush2.msra.mxu0 0.0
    %1830 = vmatprep.subr.mxu0 0.0
    %1831 = vmatpush2.msra.mxu0 0.0
    %1832 = vmatprep.subr.mxu0 0.0
    %1833 = vmatpush2.msra.mxu0 0.0
    %1834 = vmatprep.mubr.f32.mxu0 0.0
    %1835 = vmatmul.mubr.f32.gmra.mxu0 %v1768
    %v1836 = vpop.f32.mrf.mxu0
    %v1837 = vadd.f32 0.0, %v1836
    %v1838 = vpop.f32.mrf.mxu0
    %1839 = vdwg.mxu0
    %v1841 = vrot.slane %v1837, 1
    %v1842 = vrot.slane %v1837, 2
    %v1843 = vrot.slane %v1837, 3
    %v1844 = vrot.slane %v1837, 4
    %v1849 = vadd.f32 %v319, %v1841
    %v1850 = vadd.f32 %v324, %v1842
    %v1851 = vadd.f32 %v329, %v1843
    %v1852 = vadd.f32 %v334, %v1844
    %v1853 = vxor.u32 %v1849, 2147483648
    %v1854 = vxor.u32 %v1850, 2147483648
    %v1855 = vxor.u32 %v1851, 2147483648
    %v1856 = vxor.u32 %v1852, 2147483648
    %v1857 = vmul.f32 %v1853, 1.442695
    %v1858 = vpow.pop %v1857
    %v1859 = vmul.f32 %v1854, 1.442695
    %v1860 = vpow.pop %v1859
    %v1861 = vmul.f32 %v1855, 1.442695
    %v1862 = vpow.pop %v1861
    %v1863 = vmul.f32 %v1856, 1.442695
    %v1864 = vpow.pop %v1863
    %v1865 = vadd.f32 %v1858, 1.0
    %v1866 = vadd.f32 %v1860, 1.0
    %v1867 = vadd.f32 %v1862, 1.0
    %v1868 = vadd.f32 %v1864, 1.0
    %v1869 = vrcp.pop %v1865
    %v1870 = vmul.f32 1.0, %v1869
    %v1871 = vrcp.pop %v1866
    %v1872 = vmul.f32 1.0, %v1871
    %v1873 = vrcp.pop %v1867
    %v1874 = vmul.f32 1.0, %v1873
    %v1875 = vrcp.pop %v1868
    %v1876 = vmul.f32 1.0, %v1875
    %v1877 = vtanh.pop %v1849
    %v1878 = vtanh.pop %v1850
    %v1879 = vtanh.pop %v1851
    %v1880 = vtanh.pop %v1852
    %v1885 = vrot.slane %v1727, 7
    %v1886 = vrot.slane %v1728, 7
    %v1887 = vrot.slane %v1729, 7
    %v1888 = vrot.slane %v1730, 7
    %v1893 = vmul.f32 %v1870, %v1885
    %v1894 = vmul.f32 %v1872, %v1886
    %v1895 = vmul.f32 %v1874, %v1887
    %v1896 = vmul.f32 %v1876, %v1888
    %1901 = vrot.lane.b32.xlu0 %v1877, 64
    %v1902 = vpop.permute.xlu0 %1901
    %1903 = vrot.lane.b32.xlu0 %v1878, 64
    %v1904 = vpop.permute.xlu0 %1903
    %1905 = vrot.lane.b32.xlu0 %v1879, 64
    %v1906 = vpop.permute.xlu0 %1905
    %1907 = vrot.lane.b32.xlu0 %v1880, 64
    %v1908 = vpop.permute.xlu0 %1907
    %v1913 = vmul.f32 %v1870, %v1902
    %v1914 = vmul.f32 %v1872, %v1904
    %v1915 = vmul.f32 %v1874, %v1906
    %v1916 = vmul.f32 %v1876, %v1908
    %1921 = vrot.lane.b32.xlu0 %v1913, 32
    %v1922 = vpop.permute.xlu0 %1921
    %1923 = vrot.lane.b32.xlu0 %v1914, 32
    %v1924 = vpop.permute.xlu0 %1923
    %1925 = vrot.lane.b32.xlu0 %v1915, 32
    %v1926 = vpop.permute.xlu0 %1925
    %1927 = vrot.lane.b32.xlu0 %v1916, 32
    %v1928 = vpop.permute.xlu0 %1927
    %v1933 = vadd.f32 %v1893, %v1922
    %v1934 = vadd.f32 %v1894, %v1924
    %v1935 = vadd.f32 %v1895, %v1926
    %v1936 = vadd.f32 %v1896, %v1928
    %v1937 = vtanh.pop %v1933
    %v1938 = vtanh.pop %v1934
    %v1939 = vtanh.pop %v1935
    %v1940 = vtanh.pop %v1936
    %1945 = vrot.lane.b32.xlu0 %v1937, 64
    %v1946 = vpop.permute.xlu0 %1945
    %1947 = vrot.lane.b32.xlu0 %v1938, 64
    %v1948 = vpop.permute.xlu0 %1947
    %1949 = vrot.lane.b32.xlu0 %v1939, 64
    %v1950 = vpop.permute.xlu0 %1949
    %1951 = vrot.lane.b32.xlu0 %v1940, 64
    %v1952 = vpop.permute.xlu0 %1951
    %v1957 = vmul.f32 %v1870, %v1946
    %v1958 = vmul.f32 %v1872, %v1948
    %v1959 = vmul.f32 %v1874, %v1950
    %v1960 = vmul.f32 %v1876, %v1952
    %v1961 = vlaneseq
    %v1962 = vshrl.u32 %v1961, 7
    %s1963 = sld [smem:[#allocation2]]
    %v1964 = vstv %s1963
    %vm1965 = vcmp.lt.s32.totalorder %v1962, %v1964
    %v1966 = vsel %vm1965, 1, 0
    %v1967 = vcvt.s32.f32 %v1966
    %s1968 = sld [smem:[#allocation2 + $0x1]]
    %v1969 = vstv %s1968
    %vm1970 = vcmp.lt.s32.totalorder %v1962, %v1969
    %v1971 = vsel %vm1970, 1, 0
    %v1972 = vcvt.s32.f32 %v1971
    %s1973 = sld [smem:[#allocation2 + $0x2]]
    %v1974 = vstv %s1973
    %vm1975 = vcmp.lt.s32.totalorder %v1962, %v1974
    %v1976 = vsel %vm1975, 1, 0
    %v1977 = vcvt.s32.f32 %v1976
    %s1978 = sld [smem:[#allocation2 + $0x3]]
    %v1979 = vstv %s1978
    %vm1980 = vcmp.lt.s32.totalorder %v1962, %v1979
    %v1981 = vsel %vm1980, 1, 0
    %v1982 = vcvt.s32.f32 %v1981
    %vm1983 = vcmask 1040384
    %v1984 = vsel %vm1983, %v519, %v726
    %v1985 = vsel %vm1983, %v520, %v727
    %v1986 = vsel %vm1983, %v521, %v728
    %v1987 = vsel %vm1983, %v522, %v729
    %vm1988 = vcmask 1041408
    %v1989 = vsel %vm1988, %v1984, %v930
    %v1990 = vsel %vm1988, %v1985, %v931
    %v1991 = vsel %vm1988, %v1986, %v932
    %v1992 = vsel %vm1988, %v1987, %v933
    %vm1993 = vcmask 1042432
    %v1994 = vsel %vm1993, %v1989, %v1134
    %v1995 = vsel %vm1993, %v1990, %v1135
    %v1996 = vsel %vm1993, %v1991, %v1136
    %v1997 = vsel %vm1993, %v1992, %v1137
    %vm1998 = vcmask 1043456
    %v1999 = vsel %vm1998, %v1994, %v1339
    %v2000 = vsel %vm1998, %v1995, %v1340
    %v2001 = vsel %vm1998, %v1996, %v1341
    %v2002 = vsel %vm1998, %v1997, %v1342
    %vm2003 = vcmask 1044480
    %v2004 = vsel %vm2003, %v1999, %v1545
    %v2005 = vsel %vm2003, %v2000, %v1546
    %v2006 = vsel %vm2003, %v2001, %v1547
    %v2007 = vsel %vm2003, %v2002, %v1548
    %vm2008 = vcmask 1045504
    %v2009 = vsel %vm2008, %v2004, %v1751
    %v2010 = vsel %vm2008, %v2005, %v1752
    %v2011 = vsel %vm2008, %v2006, %v1753
    %v2012 = vsel %vm2008, %v2007, %v1754
    %vm2013 = vcmask 1046528
    %v2014 = vsel %vm2013, %v2009, %v1957
    %v2015 = vsel %vm2013, %v2010, %v1958
    %v2016 = vsel %vm2013, %v2011, %v1959
    %v2017 = vsel %vm2013, %v2012, %v1960
    %v2018 = vmax.f32 %v2014, 0.0
    %v2019 = vmax.f32 %v2015, 0.0
    %v2020 = vmax.f32 %v2016, 0.0
    %v2021 = vmax.f32 %v2017, 0.0
    %2023 = vset.pattern.permute.xlu0 0
    %2024 = vperm.xlu0 %2023, %v1967
    %v2025 = vpop.permute.xlu0 %2024
    %2028 = vset.pattern.permute.xlu0 0
    %2029 = vperm.xlu0 %2028, %v1972
    %v2030 = vpop.permute.xlu0 %2029
    %2033 = vset.pattern.permute.xlu0 0
    %2034 = vperm.xlu0 %2033, %v1977
    %v2035 = vpop.permute.xlu0 %2034
    %2038 = vset.pattern.permute.xlu0 0
    %2039 = vperm.xlu0 %2038, %v1982
    %v2040 = vpop.permute.xlu0 %2039
    %v2042 = vmul.f32 %v2018, %v2025
    %v2043 = vmul.f32 %v2019, %v2030
    %v2044 = vmul.f32 %v2020, %v2035
    %v2045 = vmul.f32 %v2021, %v2040
    %v2046 = vld [vmem:[#allocation12] sm:$0xff]
    %v2047 = vld [vmem:[#allocation12 + $0x8] sm:$0xff]
    %v2048 = vld [vmem:[#allocation12 + $0x10] sm:$0xff]
    %v2049 = vld [vmem:[#allocation12 + $0x18] sm:$0xff]
    %v2050 = vld [vmem:[%s8] sm:$0x1]
    %v2052 = vlaneseq
    %v2053 = vshrl.u32 %v2052, 7
    %v2054 = vsub.s32 0, %v2053
    %v2055 = vrot.slane %v2050, %v2054
    %2061 = vrot.lane.b32.xlu0 %v2042, 32
    %v2062 = vpop.permute.xlu0 %2061
    %2063 = vrot.lane.b32.xlu0 %v2043, 32
    %v2064 = vpop.permute.xlu0 %2063
    %2065 = vrot.lane.b32.xlu0 %v2044, 32
    %v2066 = vpop.permute.xlu0 %2065
    %2067 = vrot.lane.b32.xlu0 %v2045, 32
    %v2068 = vpop.permute.xlu0 %2067
    %v2069 = vsel %vm341, %v2062, 0
    %v2071 = vsel %vm341, %v2064, 0
    %v2073 = vsel %vm341, %v2066, 0
    %v2075 = vsel %vm341, %v2068, 0
    %2077 = vmatprep.subr.mxu0 0.0
    %2078 = vmatpush1.msra.mxu0 0.0
    %2079 = vmatprep.subr.mxu0 0.0
    %2080 = vmatpush1.msra.mxu0 0.0
    %2081 = vmatprep.subr.mxu0 0.0
    %2082 = vmatpush1.msra.mxu0 0.0
    %2083 = vmatprep.subr.mxu0 0.0
    %2084 = vmatpush1.msra.mxu0 0.0
    %2085 = vmatprep.subr.mxu0 0.0
    %2086 = vmatpush1.msra.mxu0 0.0
    %2087 = vmatprep.subr.mxu0 0.0
    %2088 = vmatpush1.msra.mxu0 0.0
    %2089 = vmatprep.subr.mxu0 0.0
    %2090 = vmatpush1.msra.mxu0 0.0
    %2091 = vmatprep.subr.mxu0 0.0
    %2092 = vmatpush1.msra.mxu0 0.0
    %2093 = vmatprep.subr.mxu0 0.0
    %2094 = vmatpush1.msra.mxu0 0.0
    %2095 = vmatprep.subr.mxu0 0.0
    %2096 = vmatpush1.msra.mxu0 0.0
    %2097 = vmatprep.subr.mxu0 0.0
    %2098 = vmatpush1.msra.mxu0 0.0
    %2099 = vmatprep.subr.mxu0 0.0
    %2100 = vmatpush1.msra.mxu0 0.0
    %2101 = vmatprep.subr.mxu0 0.0
    %2102 = vmatpush1.msra.mxu0 %v2049
    %2103 = vmatprep.subr.mxu0 0.0
    %2104 = vmatpush1.msra.mxu0 %v2048
    %2105 = vmatprep.subr.mxu0 0.0
    %2106 = vmatpush1.msra.mxu0 %v2047
    %2107 = vmatprep.subr.mxu0 0.0
    %2108 = vmatpush1.msra.mxu0 %v2046
    %2109 = vmatprep.subr.mxu0 0.0
    %2110 = vmatpush2.msra.mxu0 0.0
    %2111 = vmatprep.subr.mxu0 0.0
    %2112 = vmatpush2.msra.mxu0 0.0
    %2113 = vmatprep.subr.mxu0 0.0
    %2114 = vmatpush2.msra.mxu0 0.0
    %2115 = vmatprep.subr.mxu0 0.0
    %2116 = vmatpush2.msra.mxu0 0.0
    %2117 = vmatprep.subr.mxu0 0.0
    %2118 = vmatpush2.msra.mxu0 0.0
    %2119 = vmatprep.subr.mxu0 0.0
    %2120 = vmatpush2.msra.mxu0 0.0
    %2121 = vmatprep.subr.mxu0 0.0
    %2122 = vmatpush2.msra.mxu0 0.0
    %2123 = vmatprep.subr.mxu0 0.0
    %2124 = vmatpush2.msra.mxu0 0.0
    %2125 = vmatprep.subr.mxu0 0.0
    %2126 = vmatpush2.msra.mxu0 0.0
    %2127 = vmatprep.subr.mxu0 0.0
    %2128 = vmatpush2.msra.mxu0 0.0
    %2129 = vmatprep.subr.mxu0 0.0
    %2130 = vmatpush2.msra.mxu0 0.0
    %2131 = vmatprep.subr.mxu0 0.0
    %2132 = vmatpush2.msra.mxu0 0.0
    %2133 = vmatprep.subr.mxu0 0.0
    %2134 = vmatpush2.msra.mxu0 0.0
    %2135 = vmatprep.subr.mxu0 0.0
    %2136 = vmatpush2.msra.mxu0 0.0
    %2137 = vmatprep.subr.mxu0 0.0
    %2138 = vmatpush2.msra.mxu0 0.0
    %2139 = vmatprep.subr.mxu0 0.0
    %2140 = vmatpush2.msra.mxu0 0.0
    %2141 = vmatprep.mubr.f32.mxu0 0.0
    %2142 = vmatmul.mubr.f32.gmra.mxu0 %v2069
    %v2143 = vpop.f32.mrf.mxu0
    %v2144 = vadd.f32 %v2055, %v2143
    %v2145 = vpop.f32.mrf.mxu0
    %2146 = vmatprep.mubr.f32.mxu0 0.0
    %2147 = vmatmul.mubr.f32.gmra.mxu0 %v2071
    %v2148 = vpop.f32.mrf.mxu0
    %v2149 = vadd.f32 %v2055, %v2148
    %v2150 = vpop.f32.mrf.mxu0
    %2151 = vmatprep.mubr.f32.mxu0 0.0
    %2152 = vmatmul.mubr.f32.gmra.mxu0 %v2073
    %v2153 = vpop.f32.mrf.mxu0
    %v2154 = vadd.f32 %v2055, %v2153
    %v2155 = vpop.f32.mrf.mxu0
    %2156 = vmatprep.mubr.f32.mxu0 0.0
    %2157 = vmatmul.mubr.f32.gmra.mxu0 %v2075
    %v2158 = vpop.f32.mrf.mxu0
    %v2159 = vadd.f32 %v2055, %v2158
    %v2160 = vpop.f32.mrf.mxu0
    %2161 = vdwg.mxu0
    %2162 = vst [vmem:[#allocation13] sm:$0xff] %v2144
    %2163 = vst [vmem:[#allocation13 + $0x8] sm:$0xff] %v2149
    %2164 = vst [vmem:[#allocation13 + $0x10] sm:$0xff] %v2154
    %2165 = vst [vmem:[#allocation13 + $0x18] sm:$0xff] %v2159
    // Predicated region
    $region62: #{lstm_chord_embedding_forward.1} parent=1 // pred_check
      _
    $region63: #{lstm_chord_embedding_forward.1} parent=1 // pred_check_branch
      %2167 = sbr.rel (0) target = $region65
    $region64: #{lstm_chord_embedding_forward.1} parent=1 // pred_region
      %s2169 = ssub.s32 512, 512
      %2170 = vsyncadd [#allocation4], %s2169
      %s2171 = sshll.u32 [#allocation13], 4
      %s2172 = int_to_ptr.vmem [resolvable:$true] %s2171
      %2177 = dma.vmem_to_hbm [thread:$0]  %s2172, 512, %s9, [#allocation4], 128, 128, 8
    $region65: #{lstm_chord_embedding_forward.1} parent=1 // pred_fallthru
      _
    // Predicated region
    $region66: #{lstm_chord_embedding_forward.1} parent=1 // pred_check
      _
    $region67: #{lstm_chord_embedding_forward.1} parent=1 // pred_check_branch
      %2179 = sbr.rel (0) target = $region69
    $region68: #{lstm_chord_embedding_forward.1} parent=1 // pred_region
      %2180 = dma.done [#allocation4], 512
    $region69: #{lstm_chord_embedding_forward.1} parent=1 // pred_fallthru
      _
    %2181 = vsyncpa [#allocation3], 1
    %2182 = vsyncpa [#allocation8], 1
    %2183 = vsyncpa [#allocation11], 1
    %2184 = vsyncpa [#allocation4], 1
    %2185 = vsyncpa [#allocation5], 1

</llo_original>
